<compile_context>
chip_gen: v6e
topology: v6e:2x2x1
jax: 0.10.0
libtpu: 0.0.40
codegen_flags: <defaults>
</compile_context>

<pallas_src>
import functools
import math

import jax
import jax.numpy as jnp
from jax import lax
from jax.experimental import pallas as pl
from jax.experimental.pallas import tpu as pltpu

_MIB = 1024 * 1024


def _pick_tile(dim, pref, granule):
    """Largest tile <= pref that divides dim and is a multiple of granule.

    Falls back to the full dimension (block == array extent is always legal).
    """
    pref = max(granule, (pref // granule) * granule)
    if dim >= pref and dim % pref == 0:
        return pref
    t = (min(dim, pref) // granule) * granule
    while t >= granule:
        if dim % t == 0:
            return t
        t -= granule
    # TODO(synk): pad irregular large dims up to a tile multiple instead of
    # falling back to a single full-extent block.
    return dim


# ----------------------------- tiled linear ---------------------------------

def _linear_kernel(x_ref, w_ref, b_ref, o_ref, acc_ref):
    k = pl.program_id(2)

    @pl.when(k == 0)
    def _():
        acc_ref[...] = jnp.zeros_like(acc_ref)

    # MXU is fed in the input dtype (bf16 stays bf16); accumulate in f32.
    acc_ref[...] += jnp.dot(x_ref[...], w_ref[...],
                            preferred_element_type=jnp.float32)

    @pl.when(k == pl.num_programs(2) - 1)
    def _():
        y = acc_ref[...] + b_ref[...].astype(jnp.float32)
        o_ref[...] = y.astype(o_ref.dtype)


def linear(x, w, b, tm=256, tn=256, tk=256):
    """x: (M, K) @ w: (K, N) + b: (N,) -> (M, N), tiled + software-pipelined."""
    M, K = x.shape
    N = w.shape[1]
    tm = _pick_tile(M, tm, 8)
    tn = _pick_tile(N, tn, 128)   # lane-dense output stores (unmasked vst)
    tk = _pick_tile(K, tk, 128)
    grid = (M // tm, N // tn, K // tk)
    return pl.pallas_call(
        _linear_kernel,
        out_shape=jax.ShapeDtypeStruct((M, N), x.dtype),
        grid=grid,
        in_specs=[
            pl.BlockSpec((tm, tk), lambda i, j, k: (i, k)),
            pl.BlockSpec((tk, tn), lambda i, j, k: (k, j)),
            pl.BlockSpec((1, tn), lambda i, j, k: (0, j)),
        ],
        out_specs=pl.BlockSpec((tm, tn), lambda i, j, k: (i, j)),
        scratch_shapes=[pltpu.VMEM((tm, tn), jnp.float32)],
        compiler_params=pltpu.CompilerParams(
            dimension_semantics=("parallel", "parallel", "arbitrary")),
    )(x, w, b.reshape(1, N))


# ------------------- flash-style multi-head attention kernel ----------------

def _flash_mha_kernel(*args, num_heads, scale, has_mask, fuse_out):
    it = iter(args)
    q_ref = next(it)
    k_ref = next(it)
    v_ref = next(it)
    m_ref = next(it) if has_mask else None
    wo_ref = next(it) if fuse_out else None
    bo_ref = next(it) if fuse_out else None
    o_ref = next(it)
    m_sc = next(it)      # (H, tq, 1) f32 running max
    l_sc = next(it)      # (H, tq, 1) f32 running denom
    acc_sc = next(it)    # (tq, D)    f32 running numerator (heads packed)

    ki = pl.program_id(2)
    nk = pl.num_programs(2)

    @pl.when(ki == 0)
    def _():
        m_sc[...] = jnp.full_like(m_sc, -jnp.inf)
        l_sc[...] = jnp.zeros_like(l_sc)
        acc_sc[...] = jnp.zeros_like(acc_sc)

    tq = q_ref.shape[1]
    tkv = k_ref.shape[1]
    D = q_ref.shape[-1]
    dh = D // num_heads

    # Hoist + materialize the keep predicate ONCE (JAX does not CSE
    # broadcast_in_dim across the unrolled head loop).
    keep = None
    if has_mask:
        keep = jnp.broadcast_to(m_ref[0] != 0, (tq, tkv))

    # Heads are contiguous dh-wide column blocks of the packed feature dim.
    # Each head's (tq, tkv) scores/p die inside its iteration because the
    # running (m, l, acc) state is flushed to VMEM scratch before the next
    # head starts -- no concatenate, one lane-dense store at the end.
    for h in range(num_heads):
        lo = h * dh
        qh = q_ref[0, :, lo:lo + dh]          # (tq, dh), input dtype
        kh = k_ref[0, :, lo:lo + dh]          # (tkv, dh)
        vh = v_ref[0, :, lo:lo + dh]          # (tkv, dh)

        # Contract on dh directly (no in-kernel transpose); scale the f32
        # scores rather than the (possibly bf16) activations.
        s = lax.dot_general(qh, kh, (((1,), (1,)), ((), ())),
                            preferred_element_type=jnp.float32) * scale
        if has_mask:
            s = jnp.where(keep, s, -1e9)      # masked_fill(mask == 0, -1e9)

        m_prev = m_sc[h]                                     # (tq, 1)
        m_new = jnp.maximum(m_prev, jnp.max(s, axis=-1, keepdims=True))
        alpha = jnp.exp(m_prev - m_new)
        p = jnp.exp(s - m_new)                               # (tq, tkv) f32
        l_sc[h] = alpha * l_sc[h] + jnp.sum(p, axis=-1, keepdims=True)
        pv = jnp.dot(p.astype(vh.dtype), vh,
                     preferred_element_type=jnp.float32)     # (tq, dh) f32
        acc_sc[:, lo:lo + dh] = alpha * acc_sc[:, lo:lo + dh] + pv
        m_sc[h] = m_new

    @pl.when(ki == nk - 1)
    def _():
        # Normalize in-place (reciprocal -> EUP slot), then one lane-dense
        # (tq, D) store (optionally through the fused output projection).
        for h in range(num_heads):
            lo = h * dh
            inv = pl.reciprocal(l_sc[h], approx=True)
            acc_sc[:, lo:lo + dh] = acc_sc[:, lo:lo + dh] * inv
        ctx = acc_sc[...]
        if fuse_out:
            y = jnp.dot(ctx.astype(wo_ref.dtype), wo_ref[...],
                        preferred_element_type=jnp.float32)
            y = y + bo_ref[...].astype(jnp.float32)
            o_ref[0] = y.astype(o_ref.dtype)
        else:
            o_ref[0] = ctx.astype(o_ref.dtype)


def multi_head_attention(query, key, value, mask, params, num_heads,
                         fuse_qkv=False, tq=128, tkv=128,
                         fuse_out_max_bytes=8 * _MIB):
    """MultiHeadedAttention.forward (eval mode, dropout = identity).

    mask: None, or (B, 1, S) / (B, T, S) with nonzero == attend (matches the
    PyTorch module's mask.unsqueeze(1) broadcast over heads).
    fuse_qkv=True asserts self-attention (query/key/value are the same tensor)
    and uses the packed (D, 3D) projection.
    """
    B, T, D = query.shape
    S = key.shape[1]
    assert D % num_heads == 0
    dh = D // num_heads
    scale = 1.0 / math.sqrt(dh)
    dtype = query.dtype
    itemsize = jnp.dtype(dtype).itemsize

    tq_ = _pick_tile(T, tq, 8)
    tkv_ = _pick_tile(S, tkv, 128)   # mask block's last dim rides on lanes
    nq, nk = T // tq_, S // tkv_

    # --- Q/K/V projections ---------------------------------------------------
    use_packed = fuse_qkv and (D % 128 == 0) and ("w_qkv" in params)
    if use_packed:
        # One (D, 3D) matmul; attention BlockSpecs pick the q/k/v column
        # blocks (0/1/2) straight out of the packed result -- no XLA slices.
        qkv = linear(query.reshape(B * T, D), params["w_qkv"], params["b_qkv"])
        qkv = qkv.reshape(B, T, 3 * D)
        q_in = k_in = v_in = qkv
        q_spec = pl.BlockSpec((1, tq_, D), lambda b, qi, ki: (b, qi, 0))
        k_spec = pl.BlockSpec((1, tkv_, D), lambda b, qi, ki: (b, ki, 1))
        v_spec = pl.BlockSpec((1, tkv_, D), lambda b, qi, ki: (b, ki, 2))
    else:
        q_in = linear(query.reshape(B * T, D), params["wq"], params["bq"]).reshape(B, T, D)
        k_in = linear(key.reshape(B * S, D), params["wk"], params["bk"]).reshape(B, S, D)
        v_in = linear(value.reshape(B * S, D), params["wv"], params["bv"]).reshape(B, S, D)
        q_spec = pl.BlockSpec((1, tq_, D), lambda b, qi, ki: (b, qi, 0))
        k_spec = pl.BlockSpec((1, tkv_, D), lambda b, qi, ki: (b, ki, 0))
        v_spec = pl.BlockSpec((1, tkv_, D), lambda b, qi, ki: (b, ki, 0))

    # --- mask ----------------------------------------------------------------
    has_mask = mask is not None
    Tm = 1
    if has_mask:
        Tm = mask.shape[1]
        assert Tm in (1, T), "mask must be (B, 1, S) or (B, T, S)"
        if Tm == 1:
            m_spec = pl.BlockSpec((1, 1, tkv_), lambda b, qi, ki: (b, 0, ki))
        else:
            m_spec = pl.BlockSpec((1, tq_, tkv_), lambda b, qi, ki: (b, qi, ki))

    # --- fused output projection ---------------------------------------------
    wo, bo = params["wo"], params["bo"]
    wo_bytes = wo.size * jnp.dtype(wo.dtype).itemsize
    fuse_out = wo_bytes <= fuse_out_max_bytes

    in_specs = [q_spec, k_spec, v_spec]
    operands = [q_in, k_in, v_in]
    if has_mask:
        in_specs.append(m_spec)
        operands.append(mask)
    if fuse_out:
        in_specs.append(pl.BlockSpec((D, D), lambda b, qi, ki: (0, 0)))
        in_specs.append(pl.BlockSpec((1, D), lambda b, qi, ki: (0, 0)))
        operands += [wo, bo.reshape(1, D)]

    scratch = [pltpu.VMEM((num_heads, tq_, 1), jnp.float32),   # running max
               pltpu.VMEM((num_heads, tq_, 1), jnp.float32),   # running denom
               pltpu.VMEM((tq_, D), jnp.float32)]              # acc slab

    # Explicit VMEM budget (double-buffered blocks + resident weights +
    # f32 scratch, lane-padded).  Capped at 64 MiB so the same choice is
    # valid on v7x as well as v5e/v6e.
    est = 2 * itemsize * (tq_ * D + 2 * (tkv_ * D) + tq_ * D)
    if has_mask:
        est += 2 * jnp.dtype(mask.dtype).itemsize * (tq_ if Tm == T else 1) * tkv_
    if fuse_out:
        est += 2 * (wo_bytes + D * jnp.dtype(bo.dtype).itemsize)
    est += 4 * (2 * num_heads * tq_ * 128 + tq_ * max(D, 128))
    vmem_limit = int(min(max(2 * est, 32 * _MIB), 64 * _MIB))

    out = pl.pallas_call(
        functools.partial(_flash_mha_kernel, num_heads=num_heads, scale=scale,
                          has_mask=has_mask, fuse_out=fuse_out),
        out_shape=jax.ShapeDtypeStruct((B, T, D), dtype),
        grid=(B, nq, nk),
        in_specs=in_specs,
        out_specs=pl.BlockSpec((1, tq_, D), lambda b, qi, ki: (b, qi, 0)),
        scratch_shapes=scratch,
        compiler_params=pltpu.CompilerParams(
            dimension_semantics=("parallel", "parallel", "arbitrary"),
            vmem_limit_bytes=vmem_limit),
    )(*operands)

    if fuse_out:
        return out
    return linear(out.reshape(B * T, D), wo, bo).reshape(B, T, D)


# ----------------------------- pure-JAX reference ----------------------------

def mha_reference(query, key, value, mask, params, num_heads):
    with jax.default_matmul_precision("highest"):
        B, T, D = query.shape
        S = key.shape[1]
        dh = D // num_heads
        q = (query @ params["wq"] + params["bq"]).reshape(B, T, num_heads, dh).transpose(0, 2, 1, 3)
        k = (key @ params["wk"] + params["bk"]).reshape(B, S, num_heads, dh).transpose(0, 2, 1, 3)
        v = (value @ params["wv"] + params["bv"]).reshape(B, S, num_heads, dh).transpose(0, 2, 1, 3)
        scores = jnp.einsum("bhtd,bhsd->bhts", q, k) / math.sqrt(dh)
        if mask is not None:
            m = mask[:, None, :, :]                        # mask.unsqueeze(1)
            scores = jnp.where(m != 0, scores, -1e9)
        p = jax.nn.softmax(scores, axis=-1)
        ctx = jnp.einsum("bhts,bhsd->bhtd", p, v)
        ctx = ctx.transpose(0, 2, 1, 3).reshape(B, T, D)
        return ctx @ params["wo"] + params["bo"]


# ----------------------------- main -----------------------------------------

def _make_params(key, D):
    ks = jax.random.split(key, 8)
    p = {
        "wq": 0.05 * jax.random.normal(ks[0], (D, D), jnp.float32),
        "bq": 0.02 * jax.random.normal(ks[1], (D,), jnp.float32),
        "wk": 0.05 * jax.random.normal(ks[2], (D, D), jnp.float32),
        "bk": 0.02 * jax.random.normal(ks[3], (D,), jnp.float32),
        "wv": 0.05 * jax.random.normal(ks[4], (D, D), jnp.float32),
        "bv": 0.02 * jax.random.normal(ks[5], (D,), jnp.float32),
        "wo": 0.05 * jax.random.normal(ks[6], (D, D), jnp.float32),
        "bo": 0.02 * jax.random.normal(ks[7], (D,), jnp.float32),
    }
    # Pre-concatenate packed QKV weights ONCE, outside the jitted forward.
    p["w_qkv"] = jnp.concatenate([p["wq"], p["wk"], p["wv"]], axis=1)
    p["b_qkv"] = jnp.concatenate([p["bq"], p["bk"], p["bv"]], axis=0)
    return p


def _check(out, ref, shape, tag):
    assert out.shape == shape, (tag, out.shape)
    assert bool(jnp.all(jnp.isfinite(out))), tag
    err = float(jnp.max(jnp.abs(out - ref)))
    assert bool(jnp.allclose(out, ref, atol=5e-3, rtol=5e-3)), (tag, err)


if __name__ == "__main__":
    root = jax.random.PRNGKey(0)
    k1, k2, k3, k4 = jax.random.split(root, 4)

    # ---- config 1: tiny shapes, per-query (B, T, S) mask (padding + causal),
    #      unfused QKV path (D not a multiple of 128). ------------------------
    B, T, D, H = 2, 8, 32, 4
    S = T
    x = jax.random.normal(k1, (B, T, D), jnp.float32)
    lengths = jnp.array([8, 6], jnp.int32)
    pad = jnp.arange(S)[None, None, :] < lengths[:, None, None]
    causal = jnp.arange(S)[None, None, :] <= jnp.arange(T)[None, :, None]
    mask1 = (pad & causal).astype(jnp.float32)          # (B, T, S)
    params1 = _make_params(k2, D)

    fwd1 = jax.jit(functools.partial(multi_head_attention, num_heads=H, fuse_qkv=False))
    out1 = fwd1(x, x, x, mask1, params1)
    jax.block_until_ready(out1)
    _check(out1, mha_reference(x, x, x, mask1, params1, H), (B, T, D), "cfg1")

    # ---- config 2: 128-aligned heads, fused packed QKV, multi-tile flash grid
    #      (B, T/tq, S/tkv) = (2, 2, 2), padding mask (B, 1, S). --------------
    B2, T2, D2, H2 = 2, 256, 256, 2
    S2 = T2
    x2 = jax.random.normal(k3, (B2, T2, D2), jnp.float32)
    lengths2 = jnp.array([256, 192], jnp.int32)
    mask2 = (jnp.arange(S2)[None, None, :] < lengths2[:, None, None]).astype(jnp.float32)
    params2 = _make_params(k4, D2)

    fwd2 = jax.jit(functools.partial(multi_head_attention, num_heads=H2, fuse_qkv=True))
    out2 = fwd2(x2, x2, x2, mask2, params2)
    jax.block_until_ready(out2)
    _check(out2, mha_reference(x2, x2, x2, mask2, params2, H2), (B2, T2, D2), "cfg2")

    print("KERNEL_OK")
</pallas_src>

<mosaic_0001>
module attributes {stable_mosaic.version = 11 : i64} {
  func.func @_linear_kernel(%arg0: i32, %arg1: i32, %arg2: i32, %arg3: memref<16x32xf32, #tpu.memory_space<vmem>>, %arg4: memref<32x32xf32, #tpu.memory_space<vmem>>, %arg5: memref<1x32xf32, #tpu.memory_space<vmem>>, %arg6: memref<16x32xf32, #tpu.memory_space<vmem>>, %arg7: memref<16x32xf32, #tpu.memory_space<vmem>>) attributes {dimension_semantics = [#tpu.dimension_semantics<parallel>, #tpu.dimension_semantics<parallel>, #tpu.dimension_semantics<arbitrary>], iteration_bounds = array<i64: 1, 1, 1>, scalar_prefetch = 0 : i64, scratch_operands = 1 : i64, tpu.core_type = #tpu.core_type<tc>, window_params = [{transform_indices = @transform_0, window_bounds = array<i64: 16, 32>}, {transform_indices = @transform_1, window_bounds = array<i64: 32, 32>}, {transform_indices = @transform_2, window_bounds = array<i64: 1, 32>}, {transform_indices = @transform_3, window_bounds = array<i64: 16, 32>}]} {
    %c0_i32 = arith.constant 0 : i32
    %0 = arith.cmpi eq, %arg2, %c0_i32 : i32
    %1 = arith.extui %0 : i1 to i32
    %c0_i32_0 = arith.constant 0 : i32
    %2 = arith.cmpi ne, %1, %c0_i32_0 : i32
    scf.if %2 {
      %cst_10 = arith.constant 0.000000e+00 : f32
      %12 = vector.broadcast %cst_10 : f32 to vector<16x32xf32>
      %c0_11 = arith.constant 0 : index
      %c0_12 = arith.constant 0 : index
      %13 = vector.load %arg7[%c0_11, %c0_12] : memref<16x32xf32, #tpu.memory_space<vmem>>, vector<16x32xf32>
      tpu.vector_store %arg7[%c0_11, %c0_12], %12 {strides = array<i32>} : memref<16x32xf32, #tpu.memory_space<vmem>>, vector<16x32xf32>,
    } else {
    }
    %c0 = arith.constant 0 : index
    %c0_1 = arith.constant 0 : index
    %3 = vector.load %arg7[%c0, %c0_1] : memref<16x32xf32, #tpu.memory_space<vmem>>, vector<16x32xf32>
    %c0_2 = arith.constant 0 : index
    %c0_3 = arith.constant 0 : index
    %4 = vector.load %arg3[%c0_2, %c0_3] : memref<16x32xf32, #tpu.memory_space<vmem>>, vector<16x32xf32>
    %c0_4 = arith.constant 0 : index
    %c0_5 = arith.constant 0 : index
    %5 = vector.load %arg4[%c0_4, %c0_5] : memref<32x32xf32, #tpu.memory_space<vmem>>, vector<32x32xf32>
    %cst = arith.constant dense<0.000000e+00> : vector<16x32xf32>
    %6 = tpu.matmul %4, %5, %cst {dimension_numbers = #tpu.dot_dimension_numbers<[1], [0], [0], [1], [0, 0, 1, 1], [], []>} : vector<16x32xf32>, vector<32x32xf32>, vector<16x32xf32> -> vector<16x32xf32>
    %7 = arith.addf %3, %6 : vector<16x32xf32>
    %c0_6 = arith.constant 0 : index
    %c0_7 = arith.constant 0 : index
    %8 = vector.load %arg7[%c0_6, %c0_7] : memref<16x32xf32, #tpu.memory_space<vmem>>, vector<16x32xf32>
    tpu.vector_store %arg7[%c0_6, %c0_7], %7 {strides = array<i32>} : memref<16x32xf32, #tpu.memory_space<vmem>>, vector<16x32xf32>,
    %c0_i32_8 = arith.constant 0 : i32
    %9 = arith.cmpi eq, %arg2, %c0_i32_8 : i32
    %10 = arith.extui %9 : i1 to i32
    %c0_i32_9 = arith.constant 0 : i32
    %11 = arith.cmpi ne, %10, %c0_i32_9 : i32
    scf.if %11 {
      %c0_10 = arith.constant 0 : index
      %c0_11 = arith.constant 0 : index
      %12 = vector.load %arg7[%c0_10, %c0_11] : memref<16x32xf32, #tpu.memory_space<vmem>>, vector<16x32xf32>
      %c0_12 = arith.constant 0 : index
      %c0_13 = arith.constant 0 : index
      %13 = vector.load %arg5[%c0_12, %c0_13] : memref<1x32xf32, #tpu.memory_space<vmem>>, vector<1x32xf32>
      %14 = vector.broadcast %13 : vector<1x32xf32> to vector<16x32xf32>
      %15 = arith.addf %12, %14 : vector<16x32xf32>
      %c0_14 = arith.constant 0 : index
      %c0_15 = arith.constant 0 : index
      %16 = vector.load %arg6[%c0_14, %c0_15] : memref<16x32xf32, #tpu.memory_space<vmem>>, vector<16x32xf32>
      tpu.vector_store %arg6[%c0_14, %c0_15], %15 {strides = array<i32>} : memref<16x32xf32, #tpu.memory_space<vmem>>, vector<16x32xf32>,
    } else {
    }
    return
  }
  func.func @transform_0(%arg0: i32, %arg1: i32, %arg2: i32) -> (i32, i32) {
    %c0_i32 = arith.constant 0 : i32
    return %arg0, %arg2 : i32, i32
  }
  func.func @transform_1(%arg0: i32, %arg1: i32, %arg2: i32) -> (i32, i32) {
    %c0_i32 = arith.constant 0 : i32
    return %arg2, %arg1 : i32, i32
  }
  func.func @transform_2(%arg0: i32, %arg1: i32, %arg2: i32) -> (i32, i32) {
    %c0_i32 = arith.constant 0 : i32
    %c0_i32_0 = arith.constant 0 : i32
    return %c0_i32, %arg1 : i32, i32
  }
  func.func @transform_3(%arg0: i32, %arg1: i32, %arg2: i32) -> (i32, i32) {
    %c0_i32 = arith.constant 0 : i32
    return %arg0, %arg1 : i32, i32
  }
}

module attributes {stable_mosaic.version = 11 : i64} {
  func.func @_linear_kernel(%arg0: i32, %arg1: i32, %arg2: i32, %arg3: memref<16x32xf32, #tpu.memory_space<vmem>>, %arg4: memref<32x32xf32, #tpu.memory_space<vmem>>, %arg5: memref<1x32xf32, #tpu.memory_space<vmem>>, %arg6: memref<16x32xf32, #tpu.memory_space<vmem>>, %arg7: memref<16x32xf32, #tpu.memory_space<vmem>>) attributes {dimension_semantics = [#tpu.dimension_semantics<parallel>, #tpu.dimension_semantics<parallel>, #tpu.dimension_semantics<arbitrary>], iteration_bounds = array<i64: 1, 1, 1>, scalar_prefetch = 0 : i64, scratch_operands = 1 : i64, tpu.core_type = #tpu.core_type<tc>, window_params = [{transform_indices = @transform_0, window_bounds = array<i64: 16, 32>}, {transform_indices = @transform_1, window_bounds = array<i64: 32, 32>}, {transform_indices = @transform_2, window_bounds = array<i64: 1, 32>}, {transform_indices = @transform_3, window_bounds = array<i64: 16, 32>}]} {
    %c0_i32 = arith.constant 0 : i32
    %0 = arith.cmpi eq, %arg2, %c0_i32 : i32
    %1 = arith.extui %0 : i1 to i32
    %c0_i32_0 = arith.constant 0 : i32
    %2 = arith.cmpi ne, %1, %c0_i32_0 : i32
    scf.if %2 {
      %cst_10 = arith.constant 0.000000e+00 : f32
      %12 = vector.broadcast %cst_10 : f32 to vector<16x32xf32>
      %c0_11 = arith.constant 0 : index
      %c0_12 = arith.constant 0 : index
      %13 = vector.load %arg7[%c0_11, %c0_12] : memref<16x32xf32, #tpu.memory_space<vmem>>, vector<16x32xf32>
      tpu.vector_store %arg7[%c0_11, %c0_12], %12 {strides = array<i32>} : memref<16x32xf32, #tpu.memory_space<vmem>>, vector<16x32xf32>,
    } else {
    }
    %c0 = arith.constant 0 : index
    %c0_1 = arith.constant 0 : index
    %3 = vector.load %arg7[%c0, %c0_1] : memref<16x32xf32, #tpu.memory_space<vmem>>, vector<16x32xf32>
    %c0_2 = arith.constant 0 : index
    %c0_3 = arith.constant 0 : index
    %4 = vector.load %arg3[%c0_2, %c0_3] : memref<16x32xf32, #tpu.memory_space<vmem>>, vector<16x32xf32>
    %c0_4 = arith.constant 0 : index
    %c0_5 = arith.constant 0 : index
    %5 = vector.load %arg4[%c0_4, %c0_5] : memref<32x32xf32, #tpu.memory_space<vmem>>, vector<32x32xf32>
    %cst = arith.constant dense<0.000000e+00> : vector<16x32xf32>
    %6 = tpu.matmul %4, %5, %cst {dimension_numbers = #tpu.dot_dimension_numbers<[1], [0], [0], [1], [0, 0, 1, 1], [], []>} : vector<16x32xf32>, vector<32x32xf32>, vector<16x32xf32> -> vector<16x32xf32>
    %7 = arith.addf %3, %6 : vector<16x32xf32>
    %c0_6 = arith.constant 0 : index
    %c0_7 = arith.constant 0 : index
    %8 = vector.load %arg7[%c0_6, %c0_7] : memref<16x32xf32, #tpu.memory_space<vmem>>, vector<16x32xf32>
    tpu.vector_store %arg7[%c0_6, %c0_7], %7 {strides = array<i32>} : memref<16x32xf32, #tpu.memory_space<vmem>>, vector<16x32xf32>,
    %c0_i32_8 = arith.constant 0 : i32
    %9 = arith.cmpi eq, %arg2, %c0_i32_8 : i32
    %10 = arith.extui %9 : i1 to i32
    %c0_i32_9 = arith.constant 0 : i32
    %11 = arith.cmpi ne, %10, %c0_i32_9 : i32
    scf.if %11 {
      %c0_10 = arith.constant 0 : index
      %c0_11 = arith.constant 0 : index
      %12 = vector.load %arg7[%c0_10, %c0_11] : memref<16x32xf32, #tpu.memory_space<vmem>>, vector<16x32xf32>
      %c0_12 = arith.constant 0 : index
      %c0_13 = arith.constant 0 : index
      %13 = vector.load %arg5[%c0_12, %c0_13] : memref<1x32xf32, #tpu.memory_space<vmem>>, vector<1x32xf32>
      %14 = vector.broadcast %13 : vector<1x32xf32> to vector<16x32xf32>
      %15 = arith.addf %12, %14 : vector<16x32xf32>
      %c0_14 = arith.constant 0 : index
      %c0_15 = arith.constant 0 : index
      %16 = vector.load %arg6[%c0_14, %c0_15] : memref<16x32xf32, #tpu.memory_space<vmem>>, vector<16x32xf32>
      tpu.vector_store %arg6[%c0_14, %c0_15], %15 {strides = array<i32>} : memref<16x32xf32, #tpu.memory_space<vmem>>, vector<16x32xf32>,
    } else {
    }
    return
  }
  func.func @transform_0(%arg0: i32, %arg1: i32, %arg2: i32) -> (i32, i32) {
    %c0_i32 = arith.constant 0 : i32
    return %arg0, %arg2 : i32, i32
  }
  func.func @transform_1(%arg0: i32, %arg1: i32, %arg2: i32) -> (i32, i32) {
    %c0_i32 = arith.constant 0 : i32
    return %arg2, %arg1 : i32, i32
  }
  func.func @transform_2(%arg0: i32, %arg1: i32, %arg2: i32) -> (i32, i32) {
    %c0_i32 = arith.constant 0 : i32
    %c0_i32_0 = arith.constant 0 : i32
    return %c0_i32, %arg1 : i32, i32
  }
  func.func @transform_3(%arg0: i32, %arg1: i32, %arg2: i32) -> (i32, i32) {
    %c0_i32 = arith.constant 0 : i32
    return %arg0, %arg1 : i32, i32
  }
}

module attributes {stable_mosaic.version = 11 : i64} {
  func.func @_flash_mha_kernel(%arg0: i32, %arg1: i32, %arg2: i32, %arg3: memref<1x8x32xf32, #tpu.memory_space<vmem>>, %arg4: memref<1x8x32xf32, #tpu.memory_space<vmem>>, %arg5: memref<1x8x32xf32, #tpu.memory_space<vmem>>, %arg6: memref<1x8x8xf32, #tpu.memory_space<vmem>>, %arg7: memref<32x32xf32, #tpu.memory_space<vmem>>, %arg8: memref<1x32xf32, #tpu.memory_space<vmem>>, %arg9: memref<1x8x32xf32, #tpu.memory_space<vmem>>, %arg10: memref<4x8x1xf32, #tpu.memory_space<vmem>>, %arg11: memref<4x8x1xf32, #tpu.memory_space<vmem>>, %arg12: memref<8x32xf32, #tpu.memory_space<vmem>>) attributes {dimension_semantics = [#tpu.dimension_semantics<parallel>, #tpu.dimension_semantics<parallel>, #tpu.dimension_semantics<arbitrary>], iteration_bounds = array<i64: 2, 1, 1>, scalar_prefetch = 0 : i64, scratch_operands = 3 : i64, tpu.core_type = #tpu.core_type<tc>, window_params = [{transform_indices = @transform_0, window_bounds = array<i64: 1, 8, 32>}, {transform_indices = @transform_1, window_bounds = array<i64: 1, 8, 32>}, {transform_indices = @transform_2, window_bounds = array<i64: 1, 8, 32>}, {transform_indices = @transform_3, window_bounds = array<i64: 1, 8, 8>}, {pipeline_mode = #tpu.pipeline_mode<synchronous>, transform_indices = @transform_4, window_bounds = array<i64: 32, 32>}, {pipeline_mode = #tpu.pipeline_mode<synchronous>, transform_indices = @transform_5, window_bounds = array<i64: 1, 32>}, {transform_indices = @transform_6, window_bounds = array<i64: 1, 8, 32>}]} {
    %c0_i32 = arith.constant 0 : i32
    %0 = arith.cmpi eq, %arg2, %c0_i32 : i32
    %1 = arith.extui %0 : i1 to i32
    %c0_i32_0 = arith.constant 0 : i32
    %2 = arith.cmpi ne, %1, %c0_i32_0 : i32
    scf.if %2 {
      %cst_123 = arith.constant 0xFF800000 : f32
      %166 = vector.broadcast %cst_123 : f32 to vector<4x8x1xf32>
      %c0_124 = arith.constant 0 : index
      %c0_125 = arith.constant 0 : index
      %c0_126 = arith.constant 0 : index
      %167 = vector.load %arg10[%c0_124, %c0_125, %c0_126] : memref<4x8x1xf32, #tpu.memory_space<vmem>>, vector<4x8x1xf32>
      tpu.vector_store %arg10[%c0_124, %c0_125, %c0_126], %166 {strides = array<i32>} : memref<4x8x1xf32, #tpu.memory_space<vmem>>, vector<4x8x1xf32>,
      %cst_127 = arith.constant 0.000000e+00 : f32
      %168 = vector.broadcast %cst_127 : f32 to vector<4x8x1xf32>
      %c0_128 = arith.constant 0 : index
      %c0_129 = arith.constant 0 : index
      %c0_130 = arith.constant 0 : index
      %169 = vector.load %arg11[%c0_128, %c0_129, %c0_130] : memref<4x8x1xf32, #tpu.memory_space<vmem>>, vector<4x8x1xf32>
      tpu.vector_store %arg11[%c0_128, %c0_129, %c0_130], %168 {strides = array<i32>} : memref<4x8x1xf32, #tpu.memory_space<vmem>>, vector<4x8x1xf32>,
      %cst_131 = arith.constant 0.000000e+00 : f32
      %170 = vector.broadcast %cst_131 : f32 to vector<8x32xf32>
      %c0_132 = arith.constant 0 : index
      %c0_133 = arith.constant 0 : index
      %171 = vector.load %arg12[%c0_132, %c0_133] : memref<8x32xf32, #tpu.memory_space<vmem>>, vector<8x32xf32>
      tpu.vector_store %arg12[%c0_132, %c0_133], %170 {strides = array<i32>} : memref<8x32xf32, #tpu.memory_space<vmem>>, vector<8x32xf32>,
    } else {
    }
    %c0 = arith.constant 0 : index
    %c0_1 = arith.constant 0 : index
    %c0_2 = arith.constant 0 : index
    %3 = vector.load %arg6[%c0, %c0_1, %c0_2] : memref<1x8x8xf32, #tpu.memory_space<vmem>>, vector<1x8x8xf32>
    %4 = vector.shape_cast %3 : vector<1x8x8xf32> to vector<8x8xf32>
    %cst = arith.constant 0.000000e+00 : f32
    %5 = vector.broadcast %cst : f32 to vector<8x8xf32>
    %6 = arith.cmpf one, %4, %5 : vector<8x8xf32>
    %c0_3 = arith.constant 0 : index
    %c0_4 = arith.constant 0 : index
    %c0_5 = arith.constant 0 : index
    %7 = vector.load %arg3[%c0_3, %c0_4, %c0_5] : memref<1x8x32xf32, #tpu.memory_space<vmem>>, vector<1x8x8xf32>
    %8 = vector.shape_cast %7 : vector<1x8x8xf32> to vector<8x8xf32>
    %c0_6 = arith.constant 0 : index
    %c0_7 = arith.constant 0 : index
    %c0_8 = arith.constant 0 : index
    %9 = vector.load %arg4[%c0_6, %c0_7, %c0_8] : memref<1x8x32xf32, #tpu.memory_space<vmem>>, vector<1x8x8xf32>
    %10 = vector.shape_cast %9 : vector<1x8x8xf32> to vector<8x8xf32>
    %c0_9 = arith.constant 0 : index
    %c0_10 = arith.constant 0 : index
    %c0_11 = arith.constant 0 : index
    %11 = vector.load %arg5[%c0_9, %c0_10, %c0_11] : memref<1x8x32xf32, #tpu.memory_space<vmem>>, vector<1x8x8xf32>
    %12 = vector.shape_cast %11 : vector<1x8x8xf32> to vector<8x8xf32>
    %cst_12 = arith.constant dense<0.000000e+00> : vector<8x8xf32>
    %13 = tpu.matmul %8, %10, %cst_12 {dimension_numbers = #tpu.dot_dimension_numbers<[1], [1], [0], [0], [0, 0, 1, 0], [], []>} : vector<8x8xf32>, vector<8x8xf32>, vector<8x8xf32> -> vector<8x8xf32>
    %cst_13 = arith.constant 0.353553385 : f32
    %14 = vector.broadcast %cst_13 : f32 to vector<8x8xf32>
    %15 = arith.mulf %13, %14 : vector<8x8xf32>
    %cst_14 = arith.constant -1.000000e+09 : f32
    %16 = vector.broadcast %cst_14 : f32 to vector<8x8xf32>
    %17 = arith.select %6, %15, %16 : vector<8x8xi1>, vector<8x8xf32>
    %c0_15 = arith.constant 0 : index
    %c0_16 = arith.constant 0 : index
    %c0_17 = arith.constant 0 : index
    %18 = vector.load %arg10[%c0_15, %c0_16, %c0_17] : memref<4x8x1xf32, #tpu.memory_space<vmem>>, vector<1x8x1xf32>
    %19 = vector.shape_cast %18 : vector<1x8x1xf32> to vector<8x1xf32>
    %cst_18 = arith.constant dense<0xFF800000> : vector<8xf32>
    %20 = vector.multi_reduction <maximumf>, %17, %cst_18 [1] : vector<8x8xf32> to vector<8xf32>
    %21 = vector.shape_cast %20 : vector<8xf32> to vector<8x1xf32>
    %22 = arith.maximumf %19, %21 : vector<8x1xf32>
    %23 = arith.subf %19, %22 : vector<8x1xf32>
    %24 = math.exp %23 : vector<8x1xf32>
    %25 = vector.broadcast %22 : vector<8x1xf32> to vector<8x8xf32>
    %26 = arith.subf %17, %25 : vector<8x8xf32>
    %27 = math.exp %26 : vector<8x8xf32>
    %c0_19 = arith.constant 0 : index
    %c0_20 = arith.constant 0 : index
    %c0_21 = arith.constant 0 : index
    %28 = vector.load %arg11[%c0_19, %c0_20, %c0_21] : memref<4x8x1xf32, #tpu.memory_space<vmem>>, vector<1x8x1xf32>
    %29 = vector.shape_cast %28 : vector<1x8x1xf32> to vector<8x1xf32>
    %30 = arith.mulf %24, %29 : vector<8x1xf32>
    %cst_22 = arith.constant dense<0.000000e+00> : vector<8xf32>
    %31 = vector.multi_reduction <add>, %27, %cst_22 [1] : vector<8x8xf32> to vector<8xf32>
    %32 = vector.shape_cast %31 : vector<8xf32> to vector<8x1xf32>
    %33 = arith.addf %30, %32 : vector<8x1xf32>
    %c0_23 = arith.constant 0 : index
    %c0_24 = arith.constant 0 : index
    %c0_25 = arith.constant 0 : index
    %34 = vector.load %arg11[%c0_23, %c0_24, %c0_25] : memref<4x8x1xf32, #tpu.memory_space<vmem>>, vector<1x8x1xf32>
    %35 = vector.shape_cast %34 : vector<1x8x1xf32> to vector<8x1xf32>
    %36 = vector.shape_cast %33 : vector<8x1xf32> to vector<1x8x1xf32>
    tpu.vector_store %arg11[%c0_23, %c0_24, %c0_25], %36 {strides = array<i32>} : memref<4x8x1xf32, #tpu.memory_space<vmem>>, vector<1x8x1xf32>,
    %cst_26 = arith.constant dense<0.000000e+00> : vector<8x8xf32>
    %37 = tpu.matmul %27, %12, %cst_26 {dimension_numbers = #tpu.dot_dimension_numbers<[1], [0], [0], [1], [0, 0, 1, 1], [], []>} : vector<8x8xf32>, vector<8x8xf32>, vector<8x8xf32> -> vector<8x8xf32>
    %c0_27 = arith.constant 0 : index
    %c0_28 = arith.constant 0 : index
    %38 = vector.load %arg12[%c0_27, %c0_28] : memref<8x32xf32, #tpu.memory_space<vmem>>, vector<8x8xf32>
    %39 = vector.broadcast %24 : vector<8x1xf32> to vector<8x8xf32>
    %40 = arith.mulf %39, %38 : vector<8x8xf32>
    %41 = arith.addf %40, %37 : vector<8x8xf32>
    %c0_29 = arith.constant 0 : index
    %c0_30 = arith.constant 0 : index
    %42 = vector.load %arg12[%c0_29, %c0_30] : memref<8x32xf32, #tpu.memory_space<vmem>>, vector<8x8xf32>
    tpu.vector_store %arg12[%c0_29, %c0_30], %41 {strides = array<i32>} : memref<8x32xf32, #tpu.memory_space<vmem>>, vector<8x8xf32>,
    %c0_31 = arith.constant 0 : index
    %c0_32 = arith.constant 0 : index
    %c0_33 = arith.constant 0 : index
    %43 = vector.load %arg10[%c0_31, %c0_32, %c0_33] : memref<4x8x1xf32, #tpu.memory_space<vmem>>, vector<1x8x1xf32>
    %44 = vector.shape_cast %43 : vector<1x8x1xf32> to vector<8x1xf32>
    %45 = vector.shape_cast %22 : vector<8x1xf32> to vector<1x8x1xf32>
    tpu.vector_store %arg10[%c0_31, %c0_32, %c0_33], %45 {strides = array<i32>} : memref<4x8x1xf32, #tpu.memory_space<vmem>>, vector<1x8x1xf32>,
    %c0_34 = arith.constant 0 : index
    %c0_35 = arith.constant 0 : index
    %c8 = arith.constant 8 : index
    %46 = vector.load %arg3[%c0_34, %c0_35, %c8] : memref<1x8x32xf32, #tpu.memory_space<vmem>>, vector<1x8x8xf32>
    %47 = vector.shape_cast %46 : vector<1x8x8xf32> to vector<8x8xf32>
    %c0_36 = arith.constant 0 : index
    %c0_37 = arith.constant 0 : index
    %c8_38 = arith.constant 8 : index
    %48 = vector.load %arg4[%c0_36, %c0_37, %c8_38] : memref<1x8x32xf32, #tpu.memory_space<vmem>>, vector<1x8x8xf32>
    %49 = vector.shape_cast %48 : vector<1x8x8xf32> to vector<8x8xf32>
    %c0_39 = arith.constant 0 : index
    %c0_40 = arith.constant 0 : index
    %c8_41 = arith.constant 8 : index
    %50 = vector.load %arg5[%c0_39, %c0_40, %c8_41] : memref<1x8x32xf32, #tpu.memory_space<vmem>>, vector<1x8x8xf32>
    %51 = vector.shape_cast %50 : vector<1x8x8xf32> to vector<8x8xf32>
    %cst_42 = arith.constant dense<0.000000e+00> : vector<8x8xf32>
    %52 = tpu.matmul %47, %49, %cst_42 {dimension_numbers = #tpu.dot_dimension_numbers<[1], [1], [0], [0], [0, 0, 1, 0], [], []>} : vector<8x8xf32>, vector<8x8xf32>, vector<8x8xf32> -> vector<8x8xf32>
    %cst_43 = arith.constant 0.353553385 : f32
    %53 = vector.broadcast %cst_43 : f32 to vector<8x8xf32>
    %54 = arith.mulf %52, %53 : vector<8x8xf32>
    %cst_44 = arith.constant -1.000000e+09 : f32
    %55 = vector.broadcast %cst_44 : f32 to vector<8x8xf32>
    %56 = arith.select %6, %54, %55 : vector<8x8xi1>, vector<8x8xf32>
    %c1 = arith.constant 1 : index
    %c0_45 = arith.constant 0 : index
    %c0_46 = arith.constant 0 : index
    %57 = vector.load %arg10[%c1, %c0_45, %c0_46] : memref<4x8x1xf32, #tpu.memory_space<vmem>>, vector<1x8x1xf32>
    %58 = vector.shape_cast %57 : vector<1x8x1xf32> to vector<8x1xf32>
    %cst_47 = arith.constant dense<0xFF800000> : vector<8xf32>
    %59 = vector.multi_reduction <maximumf>, %56, %cst_47 [1] : vector<8x8xf32> to vector<8xf32>
    %60 = vector.shape_cast %59 : vector<8xf32> to vector<8x1xf32>
    %61 = arith.maximumf %58, %60 : vector<8x1xf32>
    %62 = arith.subf %58, %61 : vector<8x1xf32>
    %63 = math.exp %62 : vector<8x1xf32>
    %64 = vector.broadcast %61 : vector<8x1xf32> to vector<8x8xf32>
    %65 = arith.subf %56, %64 : vector<8x8xf32>
    %66 = math.exp %65 : vector<8x8xf32>
    %c1_48 = arith.constant 1 : index
    %c0_49 = arith.constant 0 : index
    %c0_50 = arith.constant 0 : index
    %67 = vector.load %arg11[%c1_48, %c0_49, %c0_50] : memref<4x8x1xf32, #tpu.memory_space<vmem>>, vector<1x8x1xf32>
    %68 = vector.shape_cast %67 : vector<1x8x1xf32> to vector<8x1xf32>
    %69 = arith.mulf %63, %68 : vector<8x1xf32>
    %cst_51 = arith.constant dense<0.000000e+00> : vector<8xf32>
    %70 = vector.multi_reduction <add>, %66, %cst_51 [1] : vector<8x8xf32> to vector<8xf32>
    %71 = vector.shape_cast %70 : vector<8xf32> to vector<8x1xf32>
    %72 = arith.addf %69, %71 : vector<8x1xf32>
    %c1_52 = arith.constant 1 : index
    %c0_53 = arith.constant 0 : index
    %c0_54 = arith.constant 0 : index
    %73 = vector.load %arg11[%c1_52, %c0_53, %c0_54] : memref<4x8x1xf32, #tpu.memory_space<vmem>>, vector<1x8x1xf32>
    %74 = vector.shape_cast %73 : vector<1x8x1xf32> to vector<8x1xf32>
    %75 = vector.shape_cast %72 : vector<8x1xf32> to vector<1x8x1xf32>
    tpu.vector_store %arg11[%c1_52, %c0_53, %c0_54], %75 {strides = array<i32>} : memref<4x8x1xf32, #tpu.memory_space<vmem>>, vector<1x8x1xf32>,
    %cst_55 = arith.constant dense<0.000000e+00> : vector<8x8xf32>
    %76 = tpu.matmul %66, %51, %cst_55 {dimension_numbers = #tpu.dot_dimension_numbers<[1], [0], [0], [1], [0, 0, 1, 1], [], []>} : vector<8x8xf32>, vector<8x8xf32>, vector<8x8xf32> -> vector<8x8xf32>
    %c0_56 = arith.constant 0 : index
    %c8_57 = arith.constant 8 : index
    %77 = vector.load %arg12[%c0_56, %c8_57] : memref<8x32xf32, #tpu.memory_space<vmem>>, vector<8x8xf32>
    %78 = vector.broadcast %63 : vector<8x1xf32> to vector<8x8xf32>
    %79 = arith.mulf %78, %77 : vector<8x8xf32>
    %80 = arith.addf %79, %76 : vector<8x8xf32>
    %c0_58 = arith.constant 0 : index
    %c8_59 = arith.constant 8 : index
    %81 = vector.load %arg12[%c0_58, %c8_59] : memref<8x32xf32, #tpu.memory_space<vmem>>, vector<8x8xf32>
    tpu.vector_store %arg12[%c0_58, %c8_59], %80 {strides = array<i32>} : memref<8x32xf32, #tpu.memory_space<vmem>>, vector<8x8xf32>,
    %c1_60 = arith.constant 1 : index
    %c0_61 = arith.constant 0 : index
    %c0_62 = arith.constant 0 : index
    %82 = vector.load %arg10[%c1_60, %c0_61, %c0_62] : memref<4x8x1xf32, #tpu.memory_space<vmem>>, vector<1x8x1xf32>
    %83 = vector.shape_cast %82 : vector<1x8x1xf32> to vector<8x1xf32>
    %84 = vector.shape_cast %61 : vector<8x1xf32> to vector<1x8x1xf32>
    tpu.vector_store %arg10[%c1_60, %c0_61, %c0_62], %84 {strides = array<i32>} : memref<4x8x1xf32, #tpu.memory_space<vmem>>, vector<1x8x1xf32>,
    %c0_63 = arith.constant 0 : index
    %c0_64 = arith.constant 0 : index
    %c16 = arith.constant 16 : index
    %85 = vector.load %arg3[%c0_63, %c0_64, %c16] : memref<1x8x32xf32, #tpu.memory_space<vmem>>, vector<1x8x8xf32>
    %86 = vector.shape_cast %85 : vector<1x8x8xf32> to vector<8x8xf32>
    %c0_65 = arith.constant 0 : index
    %c0_66 = arith.constant 0 : index
    %c16_67 = arith.constant 16 : index
    %87 = vector.load %arg4[%c0_65, %c0_66, %c16_67] : memref<1x8x32xf32, #tpu.memory_space<vmem>>, vector<1x8x8xf32>
    %88 = vector.shape_cast %87 : vector<1x8x8xf32> to vector<8x8xf32>
    %c0_68 = arith.constant 0 : index
    %c0_69 = arith.constant 0 : index
    %c16_70 = arith.constant 16 : index
    %89 = vector.load %arg5[%c0_68, %c0_69, %c16_70] : memref<1x8x32xf32, #tpu.memory_space<vmem>>, vector<1x8x8xf32>
    %90 = vector.shape_cast %89 : vector<1x8x8xf32> to vector<8x8xf32>
    %cst_71 = arith.constant dense<0.000000e+00> : vector<8x8xf32>
    %91 = tpu.matmul %86, %88, %cst_71 {dimension_numbers = #tpu.dot_dimension_numbers<[1], [1], [0], [0], [0, 0, 1, 0], [], []>} : vector<8x8xf32>, vector<8x8xf32>, vector<8x8xf32> -> vector<8x8xf32>
    %cst_72 = arith.constant 0.353553385 : f32
    %92 = vector.broadcast %cst_72 : f32 to vector<8x8xf32>
    %93 = arith.mulf %91, %92 : vector<8x8xf32>
    %cst_73 = arith.constant -1.000000e+09 : f32
    %94 = vector.broadcast %cst_73 : f32 to vector<8x8xf32>
    %95 = arith.select %6, %93, %94 : vector<8x8xi1>, vector<8x8xf32>
    %c2 = arith.constant 2 : index
    %c0_74 = arith.constant 0 : index
    %c0_75 = arith.constant 0 : index
    %96 = vector.load %arg10[%c2, %c0_74, %c0_75] : memref<4x8x1xf32, #tpu.memory_space<vmem>>, vector<1x8x1xf32>
    %97 = vector.shape_cast %96 : vector<1x8x1xf32> to vector<8x1xf32>
    %cst_76 = arith.constant dense<0xFF800000> : vector<8xf32>
    %98 = vector.multi_reduction <maximumf>, %95, %cst_76 [1] : vector<8x8xf32> to vector<8xf32>
    %99 = vector.shape_cast %98 : vector<8xf32> to vector<8x1xf32>
    %100 = arith.maximumf %97, %99 : vector<8x1xf32>
    %101 = arith.subf %97, %100 : vector<8x1xf32>
    %102 = math.exp %101 : vector<8x1xf32>
    %103 = vector.broadcast %100 : vector<8x1xf32> to vector<8x8xf32>
    %104 = arith.subf %95, %103 : vector<8x8xf32>
    %105 = math.exp %104 : vector<8x8xf32>
    %c2_77 = arith.constant 2 : index
    %c0_78 = arith.constant 0 : index
    %c0_79 = arith.constant 0 : index
    %106 = vector.load %arg11[%c2_77, %c0_78, %c0_79] : memref<4x8x1xf32, #tpu.memory_space<vmem>>, vector<1x8x1xf32>
    %107 = vector.shape_cast %106 : vector<1x8x1xf32> to vector<8x1xf32>
    %108 = arith.mulf %102, %107 : vector<8x1xf32>
    %cst_80 = arith.constant dense<0.000000e+00> : vector<8xf32>
    %109 = vector.multi_reduction <add>, %105, %cst_80 [1] : vector<8x8xf32> to vector<8xf32>
    %110 = vector.shape_cast %109 : vector<8xf32> to vector<8x1xf32>
    %111 = arith.addf %108, %110 : vector<8x1xf32>
    %c2_81 = arith.constant 2 : index
    %c0_82 = arith.constant 0 : index
    %c0_83 = arith.constant 0 : index
    %112 = vector.load %arg11[%c2_81, %c0_82, %c0_83] : memref<4x8x1xf32, #tpu.memory_space<vmem>>, vector<1x8x1xf32>
    %113 = vector.shape_cast %112 : vector<1x8x1xf32> to vector<8x1xf32>
    %114 = vector.shape_cast %111 : vector<8x1xf32> to vector<1x8x1xf32>
    tpu.vector_store %arg11[%c2_81, %c0_82, %c0_83], %114 {strides = array<i32>} : memref<4x8x1xf32, #tpu.memory_space<vmem>>, vector<1x8x1xf32>,
    %cst_84 = arith.constant dense<0.000000e+00> : vector<8x8xf32>
    %115 = tpu.matmul %105, %90, %cst_84 {dimension_numbers = #tpu.dot_dimension_numbers<[1], [0], [0], [1], [0, 0, 1, 1], [], []>} : vector<8x8xf32>, vector<8x8xf32>, vector<8x8xf32> -> vector<8x8xf32>
    %c0_85 = arith.constant 0 : index
    %c16_86 = arith.constant 16 : index
    %116 = vector.load %arg12[%c0_85, %c16_86] : memref<8x32xf32, #tpu.memory_space<vmem>>, vector<8x8xf32>
    %117 = vector.broadcast %102 : vector<8x1xf32> to vector<8x8xf32>
    %118 = arith.mulf %117, %116 : vector<8x8xf32>
    %119 = arith.addf %118, %115 : vector<8x8xf32>
    %c0_87 = arith.constant 0 : index
    %c16_88 = arith.constant 16 : index
    %120 = vector.load %arg12[%c0_87, %c16_88] : memref<8x32xf32, #tpu.memory_space<vmem>>, vector<8x8xf32>
    tpu.vector_store %arg12[%c0_87, %c16_88], %119 {strides = array<i32>} : memref<8x32xf32, #tpu.memory_space<vmem>>, vector<8x8xf32>,
    %c2_89 = arith.constant 2 : index
    %c0_90 = arith.constant 0 : index
    %c0_91 = arith.constant 0 : index
    %121 = vector.load %arg10[%c2_89, %c0_90, %c0_91] : memref<4x8x1xf32, #tpu.memory_space<vmem>>, vector<1x8x1xf32>
    %122 = vector.shape_cast %121 : vector<1x8x1xf32> to vector<8x1xf32>
    %123 = vector.shape_cast %100 : vector<8x1xf32> to vector<1x8x1xf32>
    tpu.vector_store %arg10[%c2_89, %c0_90, %c0_91], %123 {strides = array<i32>} : memref<4x8x1xf32, #tpu.memory_space<vmem>>, vector<1x8x1xf32>,
    %c0_92 = arith.constant 0 : index
    %c0_93 = arith.constant 0 : index
    %c24 = arith.constant 24 : index
    %124 = vector.load %arg3[%c0_92, %c0_93, %c24] : memref<1x8x32xf32, #tpu.memory_space<vmem>>, vector<1x8x8xf32>
    %125 = vector.shape_cast %124 : vector<1x8x8xf32> to vector<8x8xf32>
    %c0_94 = arith.constant 0 : index
    %c0_95 = arith.constant 0 : index
    %c24_96 = arith.constant 24 : index
    %126 = vector.load %arg4[%c0_94, %c0_95, %c24_96] : memref<1x8x32xf32, #tpu.memory_space<vmem>>, vector<1x8x8xf32>
    %127 = vector.shape_cast %126 : vector<1x8x8xf32> to vector<8x8xf32>
    %c0_97 = arith.constant 0 : index
    %c0_98 = arith.constant 0 : index
    %c24_99 = arith.constant 24 : index
    %128 = vector.load %arg5[%c0_97, %c0_98, %c24_99] : memref<1x8x32xf32, #tpu.memory_space<vmem>>, vector<1x8x8xf32>
    %129 = vector.shape_cast %128 : vector<1x8x8xf32> to vector<8x8xf32>
    %cst_100 = arith.constant dense<0.000000e+00> : vector<8x8xf32>
    %130 = tpu.matmul %125, %127, %cst_100 {dimension_numbers = #tpu.dot_dimension_numbers<[1], [1], [0], [0], [0, 0, 1, 0], [], []>} : vector<8x8xf32>, vector<8x8xf32>, vector<8x8xf32> -> vector<8x8xf32>
    %cst_101 = arith.constant 0.353553385 : f32
    %131 = vector.broadcast %cst_101 : f32 to vector<8x8xf32>
    %132 = arith.mulf %130, %131 : vector<8x8xf32>
    %cst_102 = arith.constant -1.000000e+09 : f32
    %133 = vector.broadcast %cst_102 : f32 to vector<8x8xf32>
    %134 = arith.select %6, %132, %133 : vector<8x8xi1>, vector<8x8xf32>
    %c3 = arith.constant 3 : index
    %c0_103 = arith.constant 0 : index
    %c0_104 = arith.constant 0 : index
    %135 = vector.load %arg10[%c3, %c0_103, %c0_104] : memref<4x8x1xf32, #tpu.memory_space<vmem>>, vector<1x8x1xf32>
    %136 = vector.shape_cast %135 : vector<1x8x1xf32> to vector<8x1xf32>
    %cst_105 = arith.constant dense<0xFF800000> : vector<8xf32>
    %137 = vector.multi_reduction <maximumf>, %134, %cst_105 [1] : vector<8x8xf32> to vector<8xf32>
    %138 = vector.shape_cast %137 : vector<8xf32> to vector<8x1xf32>
    %139 = arith.maximumf %136, %138 : vector<8x1xf32>
    %140 = arith.subf %136, %139 : vector<8x1xf32>
    %141 = math.exp %140 : vector<8x1xf32>
    %142 = vector.broadcast %139 : vector<8x1xf32> to vector<8x8xf32>
    %143 = arith.subf %134, %142 : vector<8x8xf32>
    %144 = math.exp %143 : vector<8x8xf32>
    %c3_106 = arith.constant 3 : index
    %c0_107 = arith.constant 0 : index
    %c0_108 = arith.constant 0 : index
    %145 = vector.load %arg11[%c3_106, %c0_107, %c0_108] : memref<4x8x1xf32, #tpu.memory_space<vmem>>, vector<1x8x1xf32>
    %146 = vector.shape_cast %145 : vector<1x8x1xf32> to vector<8x1xf32>
    %147 = arith.mulf %141, %146 : vector<8x1xf32>
    %cst_109 = arith.constant dense<0.000000e+00> : vector<8xf32>
    %148 = vector.multi_reduction <add>, %144, %cst_109 [1] : vector<8x8xf32> to vector<8xf32>
    %149 = vector.shape_cast %148 : vector<8xf32> to vector<8x1xf32>
    %150 = arith.addf %147, %149 : vector<8x1xf32>
    %c3_110 = arith.constant 3 : index
    %c0_111 = arith.constant 0 : index
    %c0_112 = arith.constant 0 : index
    %151 = vector.load %arg11[%c3_110, %c0_111, %c0_112] : memref<4x8x1xf32, #tpu.memory_space<vmem>>, vector<1x8x1xf32>
    %152 = vector.shape_cast %151 : vector<1x8x1xf32> to vector<8x1xf32>
    %153 = vector.shape_cast %150 : vector<8x1xf32> to vector<1x8x1xf32>
    tpu.vector_store %arg11[%c3_110, %c0_111, %c0_112], %153 {strides = array<i32>} : memref<4x8x1xf32, #tpu.memory_space<vmem>>, vector<1x8x1xf32>,
    %cst_113 = arith.constant dense<0.000000e+00> : vector<8x8xf32>
    %154 = tpu.matmul %144, %129, %cst_113 {dimension_numbers = #tpu.dot_dimension_numbers<[1], [0], [0], [1], [0, 0, 1, 1], [], []>} : vector<8x8xf32>, vector<8x8xf32>, vector<8x8xf32> -> vector<8x8xf32>
    %c0_114 = arith.constant 0 : index
    %c24_115 = arith.constant 24 : index
    %155 = vector.load %arg12[%c0_114, %c24_115] : memref<8x32xf32, #tpu.memory_space<vmem>>, vector<8x8xf32>
    %156 = vector.broadcast %141 : vector<8x1xf32> to vector<8x8xf32>
    %157 = arith.mulf %156, %155 : vector<8x8xf32>
    %158 = arith.addf %157, %154 : vector<8x8xf32>
    %c0_116 = arith.constant 0 : index
    %c24_117 = arith.constant 24 : index
    %159 = vector.load %arg12[%c0_116, %c24_117] : memref<8x32xf32, #tpu.memory_space<vmem>>, vector<8x8xf32>
    tpu.vector_store %arg12[%c0_116, %c24_117], %158 {strides = array<i32>} : memref<8x32xf32, #tpu.memory_space<vmem>>, vector<8x8xf32>,
    %c3_118 = arith.constant 3 : index
    %c0_119 = arith.constant 0 : index
    %c0_120 = arith.constant 0 : index
    %160 = vector.load %arg10[%c3_118, %c0_119, %c0_120] : memref<4x8x1xf32, #tpu.memory_space<vmem>>, vector<1x8x1xf32>
    %161 = vector.shape_cast %160 : vector<1x8x1xf32> to vector<8x1xf32>
    %162 = vector.shape_cast %139 : vector<8x1xf32> to vector<1x8x1xf32>
    tpu.vector_store %arg10[%c3_118, %c0_119, %c0_120], %162 {strides = array<i32>} : memref<4x8x1xf32, #tpu.memory_space<vmem>>, vector<1x8x1xf32>,
    %c0_i32_121 = arith.constant 0 : i32
    %163 = arith.cmpi eq, %arg2, %c0_i32_121 : i32
    %164 = arith.extui %163 : i1 to i32
    %c0_i32_122 = arith.constant 0 : i32
    %165 = arith.cmpi ne, %164, %c0_i32_122 : i32
    scf.if %165 {
      %c0_123 = arith.constant 0 : index
      %c0_124 = arith.constant 0 : index
      %c0_125 = arith.constant 0 : index
      %166 = vector.load %arg11[%c0_123, %c0_124, %c0_125] : memref<4x8x1xf32, #tpu.memory_space<vmem>>, vector<1x8x1xf32>
      %167 = vector.shape_cast %166 : vector<1x8x1xf32> to vector<8x1xf32>
      %168 = tpu.reciprocal %167 {approx = true} : vector<8x1xf32> -> vector<8x1xf32>
      %c0_126 = arith.constant 0 : index
      %c0_127 = arith.constant 0 : index
      %169 = vector.load %arg12[%c0_126, %c0_127] : memref<8x32xf32, #tpu.memory_space<vmem>>, vector<8x8xf32>
      %170 = vector.broadcast %168 : vector<8x1xf32> to vector<8x8xf32>
      %171 = arith.mulf %169, %170 : vector<8x8xf32>
      %c0_128 = arith.constant 0 : index
      %c0_129 = arith.constant 0 : index
      %172 = vector.load %arg12[%c0_128, %c0_129] : memref<8x32xf32, #tpu.memory_space<vmem>>, vector<8x8xf32>
      tpu.vector_store %arg12[%c0_128, %c0_129], %171 {strides = array<i32>} : memref<8x32xf32, #tpu.memory_space<vmem>>, vector<8x8xf32>,
      %c1_130 = arith.constant 1 : index
      %c0_131 = arith.constant 0 : index
      %c0_132 = arith.constant 0 : index
      %173 = vector.load %arg11[%c1_130, %c0_131, %c0_132] : memref<4x8x1xf32, #tpu.memory_space<vmem>>, vector<1x8x1xf32>
      %174 = vector.shape_cast %173 : vector<1x8x1xf32> to vector<8x1xf32>
      %175 = tpu.reciprocal %174 {approx = true} : vector<8x1xf32> -> vector<8x1xf32>
      %c0_133 = arith.constant 0 : index
      %c8_134 = arith.constant 8 : index
      %176 = vector.load %arg12[%c0_133, %c8_134] : memref<8x32xf32, #tpu.memory_space<vmem>>, vector<8x8xf32>
      %177 = vector.broadcast %175 : vector<8x1xf32> to vector<8x8xf32>
      %178 = arith.mulf %176, %177 : vector<8x8xf32>
      %c0_135 = arith.constant 0 : index
      %c8_136 = arith.constant 8 : index
      %179 = vector.load %arg12[%c0_135, %c8_136] : memref<8x32xf32, #tpu.memory_space<vmem>>, vector<8x8xf32>
      tpu.vector_store %arg12[%c0_135, %c8_136], %178 {strides = array<i32>} : memref<8x32xf32, #tpu.memory_space<vmem>>, vector<8x8xf32>,
      %c2_137 = arith.constant 2 : index
      %c0_138 = arith.constant 0 : index
      %c0_139 = arith.constant 0 : index
      %180 = vector.load %arg11[%c2_137, %c0_138, %c0_139] : memref<4x8x1xf32, #tpu.memory_space<vmem>>, vector<1x8x1xf32>
      %181 = vector.shape_cast %180 : vector<1x8x1xf32> to vector<8x1xf32>
      %182 = tpu.reciprocal %181 {approx = true} : vector<8x1xf32> -> vector<8x1xf32>
      %c0_140 = arith.constant 0 : index
      %c16_141 = arith.constant 16 : index
      %183 = vector.load %arg12[%c0_140, %c16_141] : memref<8x32xf32, #tpu.memory_space<vmem>>, vector<8x8xf32>
      %184 = vector.broadcast %182 : vector<8x1xf32> to vector<8x8xf32>
      %185 = arith.mulf %183, %184 : vector<8x8xf32>
      %c0_142 = arith.constant 0 : index
      %c16_143 = arith.constant 16 : index
      %186 = vector.load %arg12[%c0_142, %c16_143] : memref<8x32xf32, #tpu.memory_space<vmem>>, vector<8x8xf32>
      tpu.vector_store %arg12[%c0_142, %c16_143], %185 {strides = array<i32>} : memref<8x32xf32, #tpu.memory_space<vmem>>, vector<8x8xf32>,
      %c3_144 = arith.constant 3 : index
      %c0_145 = arith.constant 0 : index
      %c0_146 = arith.constant 0 : index
      %187 = vector.load %arg11[%c3_144, %c0_145, %c0_146] : memref<4x8x1xf32, #tpu.memory_space<vmem>>, vector<1x8x1xf32>
      %188 = vector.shape_cast %187 : vector<1x8x1xf32> to vector<8x1xf32>
      %189 = tpu.reciprocal %188 {approx = true} : vector<8x1xf32> -> vector<8x1xf32>
      %c0_147 = arith.constant 0 : index
      %c24_148 = arith.constant 24 : index
      %190 = vector.load %arg12[%c0_147, %c24_148] : memref<8x32xf32, #tpu.memory_space<vmem>>, vector<8x8xf32>
      %191 = vector.broadcast %189 : vector<8x1xf32> to vector<8x8xf32>
      %192 = arith.mulf %190, %191 : vector<8x8xf32>
      %c0_149 = arith.constant 0 : index
      %c24_150 = arith.constant 24 : index
      %193 = vector.load %arg12[%c0_149, %c24_150] : memref<8x32xf32, #tpu.memory_space<vmem>>, vector<8x8xf32>
      tpu.vector_store %arg12[%c0_149, %c24_150], %192 {strides = array<i32>} : memref<8x32xf32, #tpu.memory_space<vmem>>, vector<8x8xf32>,
      %c0_151 = arith.constant 0 : index
      %c0_152 = arith.constant 0 : index
      %194 = vector.load %arg12[%c0_151, %c0_152] : memref<8x32xf32, #tpu.memory_space<vmem>>, vector<8x32xf32>
      %c0_153 = arith.constant 0 : index
      %c0_154 = arith.constant 0 : index
      %195 = vector.load %arg7[%c0_153, %c0_154] : memref<32x32xf32, #tpu.memory_space<vmem>>, vector<32x32xf32>
      %cst_155 = arith.constant dense<0.000000e+00> : vector<8x32xf32>
      %196 = tpu.matmul %194, %195, %cst_155 {dimension_numbers = #tpu.dot_dimension_numbers<[1], [0], [0], [1], [0, 0, 1, 1], [], []>} : vector<8x32xf32>, vector<32x32xf32>, vector<8x32xf32> -> vector<8x32xf32>
      %c0_156 = arith.constant 0 : index
      %c0_157 = arith.constant 0 : index
      %197 = vector.load %arg8[%c0_156, %c0_157] : memref<1x32xf32, #tpu.memory_space<vmem>>, vector<1x32xf32>
      %198 = vector.broadcast %197 : vector<1x32xf32> to vector<8x32xf32>
      %199 = arith.addf %196, %198 : vector<8x32xf32>
      %c0_158 = arith.constant 0 : index
      %c0_159 = arith.constant 0 : index
      %c0_160 = arith.constant 0 : index
      %200 = vector.load %arg9[%c0_158, %c0_159, %c0_160] : memref<1x8x32xf32, #tpu.memory_space<vmem>>, vector<1x8x32xf32>
      %201 = vector.shape_cast %200 : vector<1x8x32xf32> to vector<8x32xf32>
      %202 = vector.shape_cast %199 : vector<8x32xf32> to vector<1x8x32xf32>
      tpu.vector_store %arg9[%c0_158, %c0_159, %c0_160], %202 {strides = array<i32>} : memref<1x8x32xf32, #tpu.memory_space<vmem>>, vector<1x8x32xf32>,
    } else {
    }
    return
  }
  func.func @transform_0(%arg0: i32, %arg1: i32, %arg2: i32) -> (i32, i32, i32) {
    %c0_i32 = arith.constant 0 : i32
    %c0_i32_0 = arith.constant 0 : i32
    return %arg0, %arg1, %c0_i32 : i32, i32, i32
  }
  func.func @transform_1(%arg0: i32, %arg1: i32, %arg2: i32) -> (i32, i32, i32) {
    %c0_i32 = arith.constant 0 : i32
    %c0_i32_0 = arith.constant 0 : i32
    return %arg0, %arg2, %c0_i32 : i32, i32, i32
  }
  func.func @transform_2(%arg0: i32, %arg1: i32, %arg2: i32) -> (i32, i32, i32) {
    %c0_i32 = arith.constant 0 : i32
    %c0_i32_0 = arith.constant 0 : i32
    return %arg0, %arg2, %c0_i32 : i32, i32, i32
  }
  func.func @transform_3(%arg0: i32, %arg1: i32, %arg2: i32) -> (i32, i32, i32) {
    %c0_i32 = arith.constant 0 : i32
    return %arg0, %arg1, %arg2 : i32, i32, i32
  }
  func.func @transform_4(%arg0: i32, %arg1: i32, %arg2: i32) -> (i32, i32) {
    %c0_i32 = arith.constant 0 : i32
    %c0_i32_0 = arith.constant 0 : i32
    %c0_i32_1 = arith.constant 0 : i32
    return %c0_i32, %c0_i32_0 : i32, i32
  }
  func.func @transform_5(%arg0: i32, %arg1: i32, %arg2: i32) -> (i32, i32) {
    %c0_i32 = arith.constant 0 : i32
    %c0_i32_0 = arith.constant 0 : i32
    %c0_i32_1 = arith.constant 0 : i32
    return %c0_i32, %c0_i32_0 : i32, i32
  }
  func.func @transform_6(%arg0: i32, %arg1: i32, %arg2: i32) -> (i32, i32, i32) {
    %c0_i32 = arith.constant 0 : i32
    %c0_i32_0 = arith.constant 0 : i32
    return %arg0, %arg1, %c0_i32 : i32, i32, i32
  }
}

</mosaic_0001>

<llo_original>
// kernel: multi_head_attention.5
$region0: #{multi_head_attention.5}
  #allocation0 [shape = 'u32[]', space=smem, size = 0x4, offset = 0x4, fixed_abs, tag = 'smem constant byte address 0x4 - core index']
  #allocation1 [shape = 'u32[144,128]{1,0:T(1,128)}', space=vmem, size = 0x12000, scoped, tag = 'internal scratch']
  #allocation2 [shape = 'f32[16,32]{1,0:T(8,128)}', space=vmem, size = 0x2000, scoped, tag = 'scratch operand']
  %s0 = inlined_call_operand.vmem [shape: f32[16,32], index: 0, kind: input, shape index: {}]
  %s1 = inlined_call_operand.vmem [shape: f32[32,32], index: 1, kind: input, shape index: {}]
  %s2 = inlined_call_operand.vmem [shape: f32[1,32], index: 2, kind: input, shape index: {}]
  %s3 = inlined_call_operand.vmem [shape: f32[16,32], index: 3, kind: output, shape index: {}]
  %s4 = sld [smem:[#allocation0]]
  $region30: #{multi_head_attention.5} parent=0
    _
  %s6 = ssub.s32 1, %s4
  %s7 = scalar_select 0, %s6, %s4
  // Predicated region
  $region2: #{multi_head_attention.5} parent=0 // pred_check
    _
  $region3: #{multi_head_attention.5} parent=0 // pred_check_branch
    %9 = sbr.rel (0) target = $region5
  $region4: #{multi_head_attention.5} parent=0 // pred_region
    _
  $region5: #{multi_head_attention.5} parent=0 // pred_fallthru
    _
  // Predicated region
  $region6: #{multi_head_attention.5} parent=0 // pred_check
    _
  $region7: #{multi_head_attention.5} parent=0 // pred_check_branch
    %11 = sbr.rel (0) target = $region9
  $region8: #{multi_head_attention.5} parent=0 // pred_region
    _
  $region9: #{multi_head_attention.5} parent=0 // pred_fallthru
    _
  // Predicated region
  $region10: #{multi_head_attention.5} parent=0 // pred_check
    _
  $region11: #{multi_head_attention.5} parent=0 // pred_check_branch
    %13 = sbr.rel (0) target = $region13
  $region12: #{multi_head_attention.5} parent=0 // pred_region
    _
  $region13: #{multi_head_attention.5} parent=0 // pred_fallthru
    _
  %p14 = scmp.eq.s32.totalorder 0, 0
  // Predicated region
  $region14: #{multi_head_attention.5} parent=0 // pred_check
    %p15 = pneg %p14
  $region15: #{multi_head_attention.5} parent=0 // pred_check_branch
    %17 = sbr.rel (%p15) target = $region17
  $region16: #{multi_head_attention.5} parent=0 // pred_region
    %vm18 = vcmask 261120
    %19 = vst.msk [vmem:[#allocation2] sm:$0xff] %vm18, 0.0
    %20 = vst.msk [vmem:[#allocation2 + $0x8] sm:$0xff] %vm18, 0.0
  $region17: #{multi_head_attention.5} parent=0 // pred_fallthru
    _
  %v21 = vld [vmem:[#allocation2] sm:$0xff]
  %v22 = vld [vmem:[#allocation2 + $0x8] sm:$0xff]
  %v23 = vld [vmem:[%s0] sm:$0xff]
  %v24 = vld [vmem:[%s0 + $0x8] sm:$0xff]
  %v25 = vld [vmem:[%s1] sm:$0xff]
  %v26 = vld [vmem:[%s1 + $0x8] sm:$0xff]
  %v27 = vld [vmem:[%s1 + $0x10] sm:$0xff]
  %v28 = vld [vmem:[%s1 + $0x18] sm:$0xff]
  %vm29 = vcmask 261120
  %v31 = vsel %vm29, %v23, 0
  %v34 = vsel %vm29, %v24, 0
  %36 = vmatprep.subr.mxu0 0.0
  %37 = vmatpush1.msra.mxu0 0.0
  %38 = vmatprep.subr.mxu0 0.0
  %39 = vmatpush1.msra.mxu0 0.0
  %40 = vmatprep.subr.mxu0 0.0
  %41 = vmatpush1.msra.mxu0 0.0
  %42 = vmatprep.subr.mxu0 0.0
  %43 = vmatpush1.msra.mxu0 0.0
  %44 = vmatprep.subr.mxu0 0.0
  %45 = vmatpush1.msra.mxu0 0.0
  %46 = vmatprep.subr.mxu0 0.0
  %47 = vmatpush1.msra.mxu0 0.0
  %48 = vmatprep.subr.mxu0 0.0
  %49 = vmatpush1.msra.mxu0 0.0
  %50 = vmatprep.subr.mxu0 0.0
  %51 = vmatpush1.msra.mxu0 0.0
  %52 = vmatprep.subr.mxu0 0.0
  %53 = vmatpush1.msra.mxu0 0.0
  %54 = vmatprep.subr.mxu0 0.0
  %55 = vmatpush1.msra.mxu0 0.0
  %56 = vmatprep.subr.mxu0 0.0
  %57 = vmatpush1.msra.mxu0 0.0
  %58 = vmatprep.subr.mxu0 0.0
  %59 = vmatpush1.msra.mxu0 0.0
  %60 = vmatprep.subr.mxu0 0.0
  %61 = vmatpush1.msra.mxu0 %v28
  %62 = vmatprep.subr.mxu0 0.0
  %63 = vmatpush1.msra.mxu0 %v27
  %64 = vmatprep.subr.mxu0 0.0
  %65 = vmatpush1.msra.mxu0 %v26
  %66 = vmatprep.subr.mxu0 0.0
  %67 = vmatpush1.msra.mxu0 %v25
  %68 = vmatprep.subr.mxu0 0.0
  %69 = vmatpush2.msra.mxu0 0.0
  %70 = vmatprep.subr.mxu0 0.0
  %71 = vmatpush2.msra.mxu0 0.0
  %72 = vmatprep.subr.mxu0 0.0
  %73 = vmatpush2.msra.mxu0 0.0
  %74 = vmatprep.subr.mxu0 0.0
  %75 = vmatpush2.msra.mxu0 0.0
  %76 = vmatprep.subr.mxu0 0.0
  %77 = vmatpush2.msra.mxu0 0.0
  %78 = vmatprep.subr.mxu0 0.0
  %79 = vmatpush2.msra.mxu0 0.0
  %80 = vmatprep.subr.mxu0 0.0
  %81 = vmatpush2.msra.mxu0 0.0
  %82 = vmatprep.subr.mxu0 0.0
  %83 = vmatpush2.msra.mxu0 0.0
  %84 = vmatprep.subr.mxu0 0.0
  %85 = vmatpush2.msra.mxu0 0.0
  %86 = vmatprep.subr.mxu0 0.0
  %87 = vmatpush2.msra.mxu0 0.0
  %88 = vmatprep.subr.mxu0 0.0
  %89 = vmatpush2.msra.mxu0 0.0
  %90 = vmatprep.subr.mxu0 0.0
  %91 = vmatpush2.msra.mxu0 0.0
  %92 = vmatprep.subr.mxu0 0.0
  %93 = vmatpush2.msra.mxu0 0.0
  %94 = vmatprep.subr.mxu0 0.0
  %95 = vmatpush2.msra.mxu0 0.0
  %96 = vmatprep.subr.mxu0 0.0
  %97 = vmatpush2.msra.mxu0 0.0
  %98 = vmatprep.subr.mxu0 0.0
  %99 = vmatpush2.msra.mxu0 0.0
  %100 = vmatprep.mubr.f32.mxu0 0.0
  %101 = vmatmul.mubr.f32.gmra.mxu0 %v31
  %v102 = vpop.f32.mrf.mxu0
  %v103 = vadd.f32 0.0, %v102
  %v104 = vpop.f32.mrf.mxu0
  %105 = vmatprep.mubr.f32.mxu0 0.0
  %106 = vmatmul.mubr.f32.gmra.mxu0 %v34
  %v107 = vpop.f32.mrf.mxu0
  %v108 = vadd.f32 0.0, %v107
  %v109 = vpop.f32.mrf.mxu0
  %110 = vdwg.mxu0
  %v111 = vadd.f32 %v21, %v103
  %v112 = vadd.f32 %v22, %v108
  %113 = vst.msk [vmem:[#allocation2] sm:$0xff] %vm29, %v111
  %114 = vst.msk [vmem:[#allocation2 + $0x8] sm:$0xff] %vm29, %v112
  // Predicated region
  $region18: #{multi_head_attention.5} parent=0 // pred_check
    %p115 = pneg %p14
  $region19: #{multi_head_attention.5} parent=0 // pred_check_branch
    %117 = sbr.rel (%p115) target = $region21
  $region20: #{multi_head_attention.5} parent=0 // pred_region
    %v118 = vld [vmem:[#allocation2] sm:$0xff]
    %v119 = vld [vmem:[#allocation2 + $0x8] sm:$0xff]
    %v120 = vld [vmem:[%s2] sm:$0x1]
    %v122 = vlaneseq
    %v123 = vshrl.u32 %v122, 7
    %v124 = vsub.s32 0, %v123
    %v125 = vrot.slane %v120, %v124
    %v127 = vadd.f32 %v118, %v125
    %v128 = vadd.f32 %v119, %v125
    %129 = vst.msk [vmem:[%s3] sm:$0xff] %vm29, %v127
    %130 = vst.msk [vmem:[%s3 + $0x8] sm:$0xff] %vm29, %v128
  $region21: #{multi_head_attention.5} parent=0 // pred_fallthru
    _
  // Predicated region
  $region22: #{multi_head_attention.5} parent=0 // pred_check
    _
  $region23: #{multi_head_attention.5} parent=0 // pred_check_branch
    %132 = sbr.rel (0) target = $region25
  $region24: #{multi_head_attention.5} parent=0 // pred_region
    _
  $region25: #{multi_head_attention.5} parent=0 // pred_fallthru
    _
  // Predicated region
  $region26: #{multi_head_attention.5} parent=0 // pred_check
    _
  $region27: #{multi_head_attention.5} parent=0 // pred_check_branch
    %134 = sbr.rel (0) target = $region29
  $region28: #{multi_head_attention.5} parent=0 // pred_region
    _
  $region29: #{multi_head_attention.5} parent=0 // pred_fallthru
    _

// kernel: multi_head_attention.4
$region0: #{multi_head_attention.4}
  #allocation0 [shape = 'u32[]', space=smem, size = 0x4, offset = 0x4, fixed_abs, tag = 'smem constant byte address 0x4 - core index']
  #allocation1 [shape = 'u32[144,128]{1,0:T(1,128)}', space=vmem, size = 0x12000, scoped, tag = 'internal scratch']
  #allocation2 [shape = 'f32[16,32]{1,0:T(8,128)}', space=vmem, size = 0x2000, scoped, tag = 'scratch operand']
  %s0 = inlined_call_operand.hbm [shape: f32[16,32], index: 0, kind: input, shape index: {}]
  %s1 = inlined_call_operand.hbm [shape: f32[32,32], index: 1, kind: input, shape index: {}]
  %s2 = inlined_call_operand.vmem [shape: f32[1,32], index: 2, kind: input, shape index: {}]
  %s3 = inlined_call_operand.vmem [shape: f32[16,32], index: 3, kind: output, shape index: {}]
  %s4 = sld [smem:[#allocation0]]
  $region38: #{multi_head_attention.4} parent=0
    _
  %s6 = ssub.s32 1, %s4
  %s7 = scalar_select 0, %s6, %s4
  $region1: #{multi_head_attention.4} parent=0
    #allocation3 [shape = 'u8[8192]{0}', space=vmem, size = 0x2000, scoped, tag = 'input window, operand 0, single buffered']
    #allocation4 [shape = 's32[1]{0}', space=sflag, size = 0x4, scoped, tag = 'scoped memory for multi_head_attention.4']
    #allocation5 [shape = 'u8[16384]{0}', space=vmem, size = 0x4000, scoped, tag = 'input window, operand 1, single buffered']
    #allocation6 [shape = 's32[1]{0}', space=sflag, size = 0x4, scoped, tag = 'scoped memory for multi_head_attention.4']
    %8 = vsyncpa [#allocation4], 0
    %9 = vsyncpa [#allocation6], 0
    // Predicated region
    $region2: #{multi_head_attention.4} parent=1 // pred_check
      _
    $region3: #{multi_head_attention.4} parent=1 // pred_check_branch
      %11 = sbr.rel (0) target = $region5
    $region4: #{multi_head_attention.4} parent=1 // pred_region
      %s13 = ssub.s32 256, 256
      %14 = vsyncadd [#allocation4], %s13
      %s15 = sshll.u32 [#allocation3], 4
      %s16 = int_to_ptr.vmem [resolvable:$true] %s15
      %21 = dma.hbm_to_vmem [thread:$0]  %s0, 256, %s16, [#allocation4], 128, 128, 8
    $region5: #{multi_head_attention.4} parent=1 // pred_fallthru
      _
    // Predicated region
    $region6: #{multi_head_attention.4} parent=1 // pred_check
      _
    $region7: #{multi_head_attention.4} parent=1 // pred_check_branch
      %23 = sbr.rel (0) target = $region9
    $region8: #{multi_head_attention.4} parent=1 // pred_region
      %s25 = ssub.s32 512, 512
      %26 = vsyncadd [#allocation6], %s25
      %s27 = sshll.u32 [#allocation5], 4
      %s28 = int_to_ptr.vmem [resolvable:$true] %s27
      %33 = dma.hbm_to_vmem [thread:$0]  %s1, 512, %s28, [#allocation6], 128, 128, 8
    $region9: #{multi_head_attention.4} parent=1 // pred_fallthru
      _
    // Predicated region
    $region10: #{multi_head_attention.4} parent=1 // pred_check
      _
    $region11: #{multi_head_attention.4} parent=1 // pred_check_branch
      %35 = sbr.rel (0) target = $region13
    $region12: #{multi_head_attention.4} parent=1 // pred_region
      _
    $region13: #{multi_head_attention.4} parent=1 // pred_fallthru
      _
    // Predicated region
    $region14: #{multi_head_attention.4} parent=1 // pred_check
      _
    $region15: #{multi_head_attention.4} parent=1 // pred_check_branch
      %37 = sbr.rel (0) target = $region17
    $region16: #{multi_head_attention.4} parent=1 // pred_region
      %38 = dma.done [#allocation4], 256
    $region17: #{multi_head_attention.4} parent=1 // pred_fallthru
      _
    // Predicated region
    $region18: #{multi_head_attention.4} parent=1 // pred_check
      _
    $region19: #{multi_head_attention.4} parent=1 // pred_check_branch
      %40 = sbr.rel (0) target = $region21
    $region20: #{multi_head_attention.4} parent=1 // pred_region
      %41 = dma.done [#allocation6], 512
    $region21: #{multi_head_attention.4} parent=1 // pred_fallthru
      _
    %p42 = scmp.eq.s32.totalorder 0, 0
    // Predicated region
    $region22: #{multi_head_attention.4} parent=1 // pred_check
      %p43 = pneg %p42
    $region23: #{multi_head_attention.4} parent=1 // pred_check_branch
      %45 = sbr.rel (%p43) target = $region25
    $region24: #{multi_head_attention.4} parent=1 // pred_region
      %vm46 = vcmask 261120
      %47 = vst.msk [vmem:[#allocation2] sm:$0xff] %vm46, 0.0
      %48 = vst.msk [vmem:[#allocation2 + $0x8] sm:$0xff] %vm46, 0.0
    $region25: #{multi_head_attention.4} parent=1 // pred_fallthru
      _
    %v49 = vld [vmem:[#allocation2] sm:$0xff]
    %v50 = vld [vmem:[#allocation2 + $0x8] sm:$0xff]
    %v51 = vld [vmem:[#allocation3] sm:$0xff]
    %v52 = vld [vmem:[#allocation3 + $0x8] sm:$0xff]
    %v53 = vld [vmem:[#allocation5] sm:$0xff]
    %v54 = vld [vmem:[#allocation5 + $0x8] sm:$0xff]
    %v55 = vld [vmem:[#allocation5 + $0x10] sm:$0xff]
    %v56 = vld [vmem:[#allocation5 + $0x18] sm:$0xff]
    %vm57 = vcmask 261120
    %v59 = vsel %vm57, %v51, 0
    %v62 = vsel %vm57, %v52, 0
    %64 = vmatprep.subr.mxu0 0.0
    %65 = vmatpush1.msra.mxu0 0.0
    %66 = vmatprep.subr.mxu0 0.0
    %67 = vmatpush1.msra.mxu0 0.0
    %68 = vmatprep.subr.mxu0 0.0
    %69 = vmatpush1.msra.mxu0 0.0
    %70 = vmatprep.subr.mxu0 0.0
    %71 = vmatpush1.msra.mxu0 0.0
    %72 = vmatprep.subr.mxu0 0.0
    %73 = vmatpush1.msra.mxu0 0.0
    %74 = vmatprep.subr.mxu0 0.0
    %75 = vmatpush1.msra.mxu0 0.0
    %76 = vmatprep.subr.mxu0 0.0
    %77 = vmatpush1.msra.mxu0 0.0
    %78 = vmatprep.subr.mxu0 0.0
    %79 = vmatpush1.msra.mxu0 0.0
    %80 = vmatprep.subr.mxu0 0.0
    %81 = vmatpush1.msra.mxu0 0.0
    %82 = vmatprep.subr.mxu0 0.0
    %83 = vmatpush1.msra.mxu0 0.0
    %84 = vmatprep.subr.mxu0 0.0
    %85 = vmatpush1.msra.mxu0 0.0
    %86 = vmatprep.subr.mxu0 0.0
    %87 = vmatpush1.msra.mxu0 0.0
    %88 = vmatprep.subr.mxu0 0.0
    %89 = vmatpush1.msra.mxu0 %v56
    %90 = vmatprep.subr.mxu0 0.0
    %91 = vmatpush1.msra.mxu0 %v55
    %92 = vmatprep.subr.mxu0 0.0
    %93 = vmatpush1.msra.mxu0 %v54
    %94 = vmatprep.subr.mxu0 0.0
    %95 = vmatpush1.msra.mxu0 %v53
    %96 = vmatprep.subr.mxu0 0.0
    %97 = vmatpush2.msra.mxu0 0.0
    %98 = vmatprep.subr.mxu0 0.0
    %99 = vmatpush2.msra.mxu0 0.0
    %100 = vmatprep.subr.mxu0 0.0
    %101 = vmatpush2.msra.mxu0 0.0
    %102 = vmatprep.subr.mxu0 0.0
    %103 = vmatpush2.msra.mxu0 0.0
    %104 = vmatprep.subr.mxu0 0.0
    %105 = vmatpush2.msra.mxu0 0.0
    %106 = vmatprep.subr.mxu0 0.0
    %107 = vmatpush2.msra.mxu0 0.0
    %108 = vmatprep.subr.mxu0 0.0
    %109 = vmatpush2.msra.mxu0 0.0
    %110 = vmatprep.subr.mxu0 0.0
    %111 = vmatpush2.msra.mxu0 0.0
    %112 = vmatprep.subr.mxu0 0.0
    %113 = vmatpush2.msra.mxu0 0.0
    %114 = vmatprep.subr.mxu0 0.0
    %115 = vmatpush2.msra.mxu0 0.0
    %116 = vmatprep.subr.mxu0 0.0
    %117 = vmatpush2.msra.mxu0 0.0
    %118 = vmatprep.subr.mxu0 0.0
    %119 = vmatpush2.msra.mxu0 0.0
    %120 = vmatprep.subr.mxu0 0.0
    %121 = vmatpush2.msra.mxu0 0.0
    %122 = vmatprep.subr.mxu0 0.0
    %123 = vmatpush2.msra.mxu0 0.0
    %124 = vmatprep.subr.mxu0 0.0
    %125 = vmatpush2.msra.mxu0 0.0
    %126 = vmatprep.subr.mxu0 0.0
    %127 = vmatpush2.msra.mxu0 0.0
    %128 = vmatprep.mubr.f32.mxu0 0.0
    %129 = vmatmul.mubr.f32.gmra.mxu0 %v59
    %v130 = vpop.f32.mrf.mxu0
    %v131 = vadd.f32 0.0, %v130
    %v132 = vpop.f32.mrf.mxu0
    %133 = vmatprep.mubr.f32.mxu0 0.0
    %134 = vmatmul.mubr.f32.gmra.mxu0 %v62
    %v135 = vpop.f32.mrf.mxu0
    %v136 = vadd.f32 0.0, %v135
    %v137 = vpop.f32.mrf.mxu0
    %138 = vdwg.mxu0
    %v139 = vadd.f32 %v49, %v131
    %v140 = vadd.f32 %v50, %v136
    %141 = vst.msk [vmem:[#allocation2] sm:$0xff] %vm57, %v139
    %142 = vst.msk [vmem:[#allocation2 + $0x8] sm:$0xff] %vm57, %v140
    // Predicated region
    $region26: #{multi_head_attention.4} parent=1 // pred_check
      %p143 = pneg %p42
    $region27: #{multi_head_attention.4} parent=1 // pred_check_branch
      %145 = sbr.rel (%p143) target = $region29
    $region28: #{multi_head_attention.4} parent=1 // pred_region
      %v146 = vld [vmem:[#allocation2] sm:$0xff]
      %v147 = vld [vmem:[#allocation2 + $0x8] sm:$0xff]
      %v148 = vld [vmem:[%s2] sm:$0x1]
      %v150 = vlaneseq
      %v151 = vshrl.u32 %v150, 7
      %v152 = vsub.s32 0, %v151
      %v153 = vrot.slane %v148, %v152
      %v155 = vadd.f32 %v146, %v153
      %v156 = vadd.f32 %v147, %v153
      %157 = vst.msk [vmem:[%s3] sm:$0xff] %vm57, %v155
      %158 = vst.msk [vmem:[%s3 + $0x8] sm:$0xff] %vm57, %v156
    $region29: #{multi_head_attention.4} parent=1 // pred_fallthru
      _
    // Predicated region
    $region30: #{multi_head_attention.4} parent=1 // pred_check
      _
    $region31: #{multi_head_attention.4} parent=1 // pred_check_branch
      %160 = sbr.rel (0) target = $region33
    $region32: #{multi_head_attention.4} parent=1 // pred_region
      _
    $region33: #{multi_head_attention.4} parent=1 // pred_fallthru
      _
    // Predicated region
    $region34: #{multi_head_attention.4} parent=1 // pred_check
      _
    $region35: #{multi_head_attention.4} parent=1 // pred_check_branch
      %162 = sbr.rel (0) target = $region37
    $region36: #{multi_head_attention.4} parent=1 // pred_region
      _
    $region37: #{multi_head_attention.4} parent=1 // pred_fallthru
      _
    %163 = vsyncpa [#allocation4], 1
    %164 = vsyncpa [#allocation6], 1

// kernel: multi_head_attention.7
$region0: #{multi_head_attention.7}
  #allocation0 [shape = 'u32[]', space=smem, size = 0x4, offset = 0x4, fixed_abs, tag = 'smem constant byte address 0x4 - core index']
  #allocation1 [shape = 'u32[144,128]{1,0:T(1,128)}', space=vmem, size = 0x12000, scoped, tag = 'internal scratch']
  #allocation2 [shape = 'f32[4,8,1]{2,1,0:T(8,128)}', space=vmem, size = 0x4000, scoped, tag = 'scratch operand']
  #allocation3 [shape = 'f32[4,8,1]{2,1,0:T(8,128)}', space=vmem, size = 0x4000, scoped, tag = 'scratch operand']
  #allocation4 [shape = 'f32[8,32]{1,0:T(8,128)}', space=vmem, size = 0x1000, scoped, tag = 'scratch operand']
  %s0 = inlined_call_operand.vmem [shape: f32[2,8,32], index: 0, kind: input, shape index: {}]
  %s1 = inlined_call_operand.vmem [shape: f32[2,8,32], index: 1, kind: input, shape index: {}]
  %s2 = inlined_call_operand.vmem [shape: f32[2,8,32], index: 2, kind: input, shape index: {}]
  %s3 = inlined_call_operand.vmem [shape: f32[2,8,8], index: 3, kind: input, shape index: {}]
  %s4 = inlined_call_operand.vmem [shape: f32[32,32], index: 4, kind: input, shape index: {}]
  %s5 = inlined_call_operand.vmem [shape: f32[1,32], index: 5, kind: input, shape index: {}]
  %s6 = inlined_call_operand.hbm [shape: f32[2,8,32], index: 6, kind: output, shape index: {}]
  %s7 = sld [smem:[#allocation0]]
  $region65: #{multi_head_attention.7} parent=0
    _
  %s9 = ssub.s32 1, %s7
  %s10 = scalar_select 0, %s9, %s7
  $region1: #{multi_head_attention.7} parent=0
    #allocation5 [shape = 'u8[8192]{0}', space=vmem, size = 0x2000, scoped, tag = 'output window, operand 0']
    #allocation6 [shape = 's32[2]{0}', space=sflag, size = 0x8, scoped, tag = 'scoped memory for multi_head_attention.7']
    %11 = vsyncpa [#allocation6], 0
    %s12 = scalar_lea.sflag [#allocation6], 1
    %13 = vsyncpa %s12, 0
    loop: start=0, step=1, limit=4
    $region2: #{multi_head_attention.7} parent=1 // loop_pre_header
      _
    $region3: #{multi_head_attention.7} parent=1 // loop_header
      %s15 = sphi 0, %s19
      %p16 = scmp.ge.s32.totalorder %s15, 4
      %s22 = sphi 0, %s41
      %s23 = sphi 0, %s37
      %s24 = sphi 0, %s33
      %s25 = sphi 0, %s22
      %s26 = sphi 0, %s23
      %s27 = sphi 0, %s24
      %s28 = sphi 0, %s25
      %s29 = sphi 0, %s26
      %s30 = sphi 0, %s27
      %s46 = sphi 0, %s48
      %s49 = sphi 0, %s46
      %s50 = sphi 0, %s49
      %s66 = sphi 0, %s50
      %s74 = sphi 0, %s76
      %s77 = sphi 0, %s74
      %s78 = sphi 0, %s77
      %s94 = sphi 0, %s78
      %s102 = sphi 0, %s104
      %s105 = sphi 0, %s102
      %s106 = sphi 0, %s105
      %s122 = sphi 0, %s106
      %s132 = sphi 0, %s134
      %s135 = sphi 0, %s132
      %s136 = sphi 0, %s135
      %s152 = sphi 0, %s136
      %s156 = sphi 0, %s156
      %s158 = sphi 0, %s156
      %s159 = sphi 0, %s158
      %s173 = sphi 0, %s159
      %s177 = sphi 0, %s177
      %s179 = sphi 0, %s177
      %s180 = sphi 0, %s179
      %s194 = sphi 0, %s180
      %s202 = sphi 0, %s204
      %s205 = sphi 0, %s202
      %s206 = sphi 0, %s205
      %s222 = sphi 0, %s206
    $region4: #{multi_head_attention.7} parent=1 // loop_header_branch
      %18 = sbr.rel (%p16) target = $region8
    $region5: #{multi_head_attention.7} parent=1 // loop_body
      %s20 = ssub.s32 %s15, 1
      %s21 = ssub.s32 %s15, 2
      %s31 = sadd.s32 1, %s24
      %p32 = scmp.ge.s32.totalorder %s31, 1
      %s33 = scalar_select %p32, 0, %s31
      %s34 = sadd.s32 1, %s23
      %s35 = scalar_select %p32, %s34, %s23
      %p36 = scmp.ge.s32.totalorder %s35, 1
      %s37 = scalar_select %p36, 0, %s35
      %s38 = sadd.s32 1, %s22
      %s39 = scalar_select %p36, %s38, %s22
      %p40 = scmp.ge.s32.totalorder %s39, 2
      %s41 = scalar_select %p40, 0, %s39
      %s42 = ssub.s32 %s22, %s41
      %s43 = ssub.s32 %s23, %s37
      %s44 = sor.u32 %s42, %s43
      %p45 = scmp.eq.s32.totalorder %s44, 0
      %s47 = sadd.s32 %s46, 1
      %s48 = scalar_select %p45, %s46, %s47
      %p51 = pneg %p45
      %p52 = scmp.eq.s32.totalorder %s15, 1
      %p53 = por %p51, %p52
      %p54 = scmp.ne.s32.totalorder %s46, %s49
      %p55 = scmp.eq.s32.totalorder %s15, 0
      %p56 = por %p54, %p55
      %p57 = scmp.ne.s32.totalorder %s46, %s49
      %p58 = scmp.eq.s32.totalorder %s20, 1
      %p59 = por %p57, %p58
      %p60 = scmp.ne.s32.totalorder %s49, %s50
      %p61 = scmp.eq.s32.totalorder %s20, 0
      %p62 = por %p60, %p61
      %p63 = scmp.ne.s32.totalorder %s49, %s50
      %p64 = scmp.eq.s32.totalorder %s21, 1
      %p65 = por %p63, %p64
      %p67 = scmp.ne.s32.totalorder %s50, %s66
      %p68 = scmp.eq.s32.totalorder %s21, 0
      %p69 = por %p67, %p68
      %s70 = ssub.s32 %s22, %s41
      %s71 = ssub.s32 %s24, %s33
      %s72 = sor.u32 %s70, %s71
      %p73 = scmp.eq.s32.totalorder %s72, 0
      %s75 = sadd.s32 %s74, 1
      %s76 = scalar_select %p73, %s74, %s75
      %p79 = pneg %p73
      %p80 = scmp.eq.s32.totalorder %s15, 1
      %p81 = por %p79, %p80
      %p82 = scmp.ne.s32.totalorder %s74, %s77
      %p83 = scmp.eq.s32.totalorder %s15, 0
      %p84 = por %p82, %p83
      %p85 = scmp.ne.s32.totalorder %s74, %s77
      %p86 = scmp.eq.s32.totalorder %s20, 1
      %p87 = por %p85, %p86
      %p88 = scmp.ne.s32.totalorder %s77, %s78
      %p89 = scmp.eq.s32.totalorder %s20, 0
      %p90 = por %p88, %p89
      %p91 = scmp.ne.s32.totalorder %s77, %s78
      %p92 = scmp.eq.s32.totalorder %s21, 1
      %p93 = por %p91, %p92
      %p95 = scmp.ne.s32.totalorder %s78, %s94
      %p96 = scmp.eq.s32.totalorder %s21, 0
      %p97 = por %p95, %p96
      %s98 = ssub.s32 %s22, %s41
      %s99 = ssub.s32 %s24, %s33
      %s100 = sor.u32 %s98, %s99
      %p101 = scmp.eq.s32.totalorder %s100, 0
      %s103 = sadd.s32 %s102, 1
      %s104 = scalar_select %p101, %s102, %s103
      %p107 = pneg %p101
      %p108 = scmp.eq.s32.totalorder %s15, 1
      %p109 = por %p107, %p108
      %p110 = scmp.ne.s32.totalorder %s102, %s105
      %p111 = scmp.eq.s32.totalorder %s15, 0
      %p112 = por %p110, %p111
      %p113 = scmp.ne.s32.totalorder %s102, %s105
      %p114 = scmp.eq.s32.totalorder %s20, 1
      %p115 = por %p113, %p114
      %p116 = scmp.ne.s32.totalorder %s105, %s106
      %p117 = scmp.eq.s32.totalorder %s20, 0
      %p118 = por %p116, %p117
      %p119 = scmp.ne.s32.totalorder %s105, %s106
      %p120 = scmp.eq.s32.totalorder %s21, 1
      %p121 = por %p119, %p120
      %p123 = scmp.ne.s32.totalorder %s106, %s122
      %p124 = scmp.eq.s32.totalorder %s21, 0
      %p125 = por %p123, %p124
      %s126 = ssub.s32 %s22, %s41
      %s127 = ssub.s32 %s23, %s37
      %s128 = sor.u32 %s126, %s127
      %s129 = ssub.s32 %s24, %s33
      %s130 = sor.u32 %s128, %s129
      %p131 = scmp.eq.s32.totalorder %s130, 0
      %s133 = sadd.s32 %s132, 1
      %s134 = scalar_select %p131, %s132, %s133
      %p137 = pneg %p131
      %p138 = scmp.eq.s32.totalorder %s15, 1
      %p139 = por %p137, %p138
      %p140 = scmp.ne.s32.totalorder %s132, %s135
      %p141 = scmp.eq.s32.totalorder %s15, 0
      %p142 = por %p140, %p141
      %p143 = scmp.ne.s32.totalorder %s132, %s135
      %p144 = scmp.eq.s32.totalorder %s20, 1
      %p145 = por %p143, %p144
      %p146 = scmp.ne.s32.totalorder %s135, %s136
      %p147 = scmp.eq.s32.totalorder %s20, 0
      %p148 = por %p146, %p147
      %p149 = scmp.ne.s32.totalorder %s135, %s136
      %p150 = scmp.eq.s32.totalorder %s21, 1
      %p151 = por %p149, %p150
      %p153 = scmp.ne.s32.totalorder %s136, %s152
      %p154 = scmp.eq.s32.totalorder %s21, 0
      %p155 = por %p153, %p154
      %s157 = sadd.s32 %s156, 1
      %p160 = scmp.eq.s32.totalorder %s15, 1
      %p161 = scmp.ne.s32.totalorder %s156, %s158
      %p162 = scmp.eq.s32.totalorder %s15, 0
      %p163 = por %p161, %p162
      %p164 = scmp.ne.s32.totalorder %s156, %s158
      %p165 = scmp.eq.s32.totalorder %s20, 1
      %p166 = por %p164, %p165
      %p167 = scmp.ne.s32.totalorder %s158, %s159
      %p168 = scmp.eq.s32.totalorder %s20, 0
      %p169 = por %p167, %p168
      %p170 = scmp.ne.s32.totalorder %s158, %s159
      %p171 = scmp.eq.s32.totalorder %s21, 1
      %p172 = por %p170, %p171
      %p174 = scmp.ne.s32.totalorder %s159, %s173
      %p175 = scmp.eq.s32.totalorder %s21, 0
      %p176 = por %p174, %p175
      %s178 = sadd.s32 %s177, 1
      %p181 = scmp.eq.s32.totalorder %s15, 1
      %p182 = scmp.ne.s32.totalorder %s177, %s179
      %p183 = scmp.eq.s32.totalorder %s15, 0
      %p184 = por %p182, %p183
      %p185 = scmp.ne.s32.totalorder %s177, %s179
      %p186 = scmp.eq.s32.totalorder %s20, 1
      %p187 = por %p185, %p186
      %p188 = scmp.ne.s32.totalorder %s179, %s180
      %p189 = scmp.eq.s32.totalorder %s20, 0
      %p190 = por %p188, %p189
      %p191 = scmp.ne.s32.totalorder %s179, %s180
      %p192 = scmp.eq.s32.totalorder %s21, 1
      %p193 = por %p191, %p192
      %p195 = scmp.ne.s32.totalorder %s180, %s194
      %p196 = scmp.eq.s32.totalorder %s21, 0
      %p197 = por %p195, %p196
      %s198 = ssub.s32 %s22, %s41
      %s199 = ssub.s32 %s23, %s37
      %s200 = sor.u32 %s198, %s199
      %p201 = scmp.eq.s32.totalorder %s200, 0
      %s203 = sadd.s32 %s202, 1
      %s204 = scalar_select %p201, %s202, %s203
      %p207 = pneg %p201
      %p208 = scmp.eq.s32.totalorder %s15, 1
      %p209 = por %p207, %p208
      %p210 = scmp.ne.s32.totalorder %s202, %s205
      %p211 = scmp.eq.s32.totalorder %s15, 0
      %p212 = por %p210, %p211
      %p213 = scmp.ne.s32.totalorder %s202, %s205
      %p214 = scmp.eq.s32.totalorder %s20, 1
      %p215 = por %p213, %p214
      %p216 = scmp.ne.s32.totalorder %s205, %s206
      %p217 = scmp.eq.s32.totalorder %s20, 0
      %p218 = por %p216, %p217
      %p219 = scmp.ne.s32.totalorder %s205, %s206
      %p220 = scmp.eq.s32.totalorder %s21, 1
      %p221 = por %p219, %p220
      %p223 = scmp.ne.s32.totalorder %s206, %s222
      %p224 = scmp.eq.s32.totalorder %s21, 0
      %p225 = por %p223, %p224
      %p226 = scmp.le.s32.totalorder 1, %s15
      %p227 = scmp.lt.s32.totalorder %s15, 3
      %p228 = pnand %p226, %p227
      %p229 = pneg %p228
      // Predicated region
      $region9: #{multi_head_attention.7} parent=5 // pred_check
        _
      $region10: #{multi_head_attention.7} parent=5 // pred_check_branch
        %231 = sbr.rel (%p228) target = $region12
      $region11: #{multi_head_attention.7} parent=5 // pred_region
        %s232 = ssub.s32 %s15, 1
        // Predicated region
        $region13: #{multi_head_attention.7} parent=11 // pred_check
          %p233 = pneg %p169
        $region14: #{multi_head_attention.7} parent=11 // pred_check_branch
          %235 = sbr.rel (%p233) target = $region16
        $region15: #{multi_head_attention.7} parent=11 // pred_region
          _
        $region16: #{multi_head_attention.7} parent=11 // pred_fallthru
          _
        // Predicated region
        $region17: #{multi_head_attention.7} parent=11 // pred_check
          %p236 = pneg %p190
        $region18: #{multi_head_attention.7} parent=11 // pred_check_branch
          %238 = sbr.rel (%p236) target = $region20
        $region19: #{multi_head_attention.7} parent=11 // pred_region
          _
        $region20: #{multi_head_attention.7} parent=11 // pred_fallthru
          _
      $region12: #{multi_head_attention.7} parent=5 // pred_fallthru
        _
      %p239 = scmp.lt.s32.totalorder %s15, 2
      // Predicated region
      $region21: #{multi_head_attention.7} parent=5 // pred_check
        %p240 = pneg %p239
      $region22: #{multi_head_attention.7} parent=5 // pred_check_branch
        %242 = sbr.rel (%p240) target = $region24
      $region23: #{multi_head_attention.7} parent=5 // pred_region
        // Predicated region
        $region25: #{multi_head_attention.7} parent=23 // pred_check
          %p243 = pneg %p56
        $region26: #{multi_head_attention.7} parent=23 // pred_check_branch
          %245 = sbr.rel (%p243) target = $region28
        $region27: #{multi_head_attention.7} parent=23 // pred_region
          %p246 = scmp.lt.s32.totalorder %s22, 1
          %s247 = scalar_select %p246, %s22, 1
          %p248 = scmp.lt.s32.totalorder %s23, 0
          %s249 = scalar_select %p248, %s23, 0
          %s250 = sadd.s32 %s249, %s247
          %s251 = smul.addr %s250, 8
          %s252 = scalar_lea.vmem %s0, %s251
        $region28: #{multi_head_attention.7} parent=23 // pred_fallthru
          _
        // Predicated region
        $region29: #{multi_head_attention.7} parent=23 // pred_check
          %p253 = pneg %p84
        $region30: #{multi_head_attention.7} parent=23 // pred_check_branch
          %255 = sbr.rel (%p253) target = $region32
        $region31: #{multi_head_attention.7} parent=23 // pred_region
          %p256 = scmp.lt.s32.totalorder %s22, 1
          %s257 = scalar_select %p256, %s22, 1
          %p258 = scmp.lt.s32.totalorder %s24, 0
          %s259 = scalar_select %p258, %s24, 0
          %s260 = sadd.s32 %s259, %s257
          %s261 = smul.addr %s260, 8
          %s262 = scalar_lea.vmem %s1, %s261
        $region32: #{multi_head_attention.7} parent=23 // pred_fallthru
          _
        // Predicated region
        $region33: #{multi_head_attention.7} parent=23 // pred_check
          %p263 = pneg %p112
        $region34: #{multi_head_attention.7} parent=23 // pred_check_branch
          %265 = sbr.rel (%p263) target = $region36
        $region35: #{multi_head_attention.7} parent=23 // pred_region
          %p266 = scmp.lt.s32.totalorder %s22, 1
          %s267 = scalar_select %p266, %s22, 1
          %p268 = scmp.lt.s32.totalorder %s24, 0
          %s269 = scalar_select %p268, %s24, 0
          %s270 = sadd.s32 %s269, %s267
          %s271 = smul.addr %s270, 8
          %s272 = scalar_lea.vmem %s2, %s271
        $region36: #{multi_head_attention.7} parent=23 // pred_fallthru
          _
        // Predicated region
        $region37: #{multi_head_attention.7} parent=23 // pred_check
          %p273 = pneg %p142
        $region38: #{multi_head_attention.7} parent=23 // pred_check_branch
          %275 = sbr.rel (%p273) target = $region40
        $region39: #{multi_head_attention.7} parent=23 // pred_region
          %p276 = scmp.lt.s32.totalorder %s22, 1
          %s277 = scalar_select %p276, %s22, 1
          %p278 = scmp.lt.s32.totalorder %s23, 0
          %s279 = scalar_select %p278, %s23, 0
          %p280 = scmp.lt.s32.totalorder %s24, 0
          %s281 = scalar_select %p280, %s24, 0
          %s282 = sadd.s32 %s281, %s279
          %s283 = sadd.s32 %s282, %s277
          %s284 = smul.addr %s283, 8
          %s285 = scalar_lea.vmem %s3, %s284
        $region40: #{multi_head_attention.7} parent=23 // pred_fallthru
          _
      $region24: #{multi_head_attention.7} parent=5 // pred_fallthru
        _
      %p286 = scmp.le.s32.totalorder 1, %s15
      %p287 = scmp.lt.s32.totalorder %s15, 3
      %p288 = pnand %p286, %p287
      %p289 = pneg %p288
      // Predicated region
      $region41: #{multi_head_attention.7} parent=5 // pred_check
        _
      $region42: #{multi_head_attention.7} parent=5 // pred_check_branch
        %291 = sbr.rel (%p288) target = $region44
      $region43: #{multi_head_attention.7} parent=5 // pred_region
        %s292 = ssub.s32 %s15, 1
        %p293 = scmp.lt.s32.totalorder %s25, 1
        %s294 = scalar_select %p293, %s25, 1
        %p295 = scmp.lt.s32.totalorder %s26, 0
        %s296 = scalar_select %p295, %s26, 0
        %s297 = sadd.s32 %s296, %s294
        %s298 = smul.addr %s297, 8
        %s299 = scalar_lea.vmem %s0, %s298
        %p300 = pneg %p62
        %p301 = pneg %p59
        %p302 = scmp.lt.s32.totalorder %s25, 1
        %s303 = scalar_select %p302, %s25, 1
        %p304 = scmp.lt.s32.totalorder %s27, 0
        %s305 = scalar_select %p304, %s27, 0
        %s306 = sadd.s32 %s305, %s303
        %s307 = smul.addr %s306, 8
        %s308 = scalar_lea.vmem %s1, %s307
        %p309 = pneg %p90
        %p310 = pneg %p87
        %p311 = scmp.lt.s32.totalorder %s25, 1
        %s312 = scalar_select %p311, %s25, 1
        %p313 = scmp.lt.s32.totalorder %s27, 0
        %s314 = scalar_select %p313, %s27, 0
        %s315 = sadd.s32 %s314, %s312
        %s316 = smul.addr %s315, 8
        %s317 = scalar_lea.vmem %s2, %s316
        %p318 = pneg %p118
        %p319 = pneg %p115
        %p320 = scmp.lt.s32.totalorder %s25, 1
        %s321 = scalar_select %p320, %s25, 1
        %p322 = scmp.lt.s32.totalorder %s26, 0
        %s323 = scalar_select %p322, %s26, 0
        %p324 = scmp.lt.s32.totalorder %s27, 0
        %s325 = scalar_select %p324, %s27, 0
        %s326 = sadd.s32 %s325, %s323
        %s327 = sadd.s32 %s326, %s321
        %s328 = smul.addr %s327, 8
        %s329 = scalar_lea.vmem %s3, %s328
        %p330 = pneg %p148
        %p331 = pneg %p145
        %p332 = pneg %p169
        %p333 = pneg %p166
        %p334 = pneg %p190
        %p335 = pneg %p187
        %p336 = pneg %p218
        %p337 = pneg %p215
        %s338 = sand.u32 %s205, 1
        %s339 = scalar_lea.sflag [#allocation6], %s338
        %s340 = sand.u32 %s205, 1
        %s341 = smul.addr %s340, 8
        %s342 = scalar_lea.vmem [#allocation5], %s341
        %p343 = scmp.lt.s32.totalorder %s25, 1
        %s344 = scalar_select %p343, %s25, 1
        %p345 = scmp.lt.s32.totalorder %s26, 0
        %s346 = scalar_select %p345, %s26, 0
        %s347 = sadd.s32 %s346, %s344
        %s348 = smul.addr %s347, 8
        %s349 = scalar_lea.vmem %s0, %s348
        %p350 = scmp.lt.s32.totalorder %s25, 1
        %s351 = scalar_select %p350, %s25, 1
        %p352 = scmp.lt.s32.totalorder %s27, 0
        %s353 = scalar_select %p352, %s27, 0
        %s354 = sadd.s32 %s353, %s351
        %s355 = smul.addr %s354, 8
        %s356 = scalar_lea.vmem %s1, %s355
        %p357 = scmp.lt.s32.totalorder %s25, 1
        %s358 = scalar_select %p357, %s25, 1
        %p359 = scmp.lt.s32.totalorder %s27, 0
        %s360 = scalar_select %p359, %s27, 0
        %s361 = sadd.s32 %s360, %s358
        %s362 = smul.addr %s361, 8
        %s363 = scalar_lea.vmem %s2, %s362
        %p364 = scmp.lt.s32.totalorder %s25, 1
        %s365 = scalar_select %p364, %s25, 1
        %p366 = scmp.lt.s32.totalorder %s26, 0
        %s367 = scalar_select %p366, %s26, 0
        %p368 = scmp.lt.s32.totalorder %s27, 0
        %s369 = scalar_select %p368, %s27, 0
        %s370 = sadd.s32 %s369, %s367
        %s371 = sadd.s32 %s370, %s365
        %s372 = smul.addr %s371, 8
        %s373 = scalar_lea.vmem %s3, %s372
        %p374 = scmp.eq.s32.totalorder %s27, 0
        // Predicated region
        $region45: #{multi_head_attention.7} parent=43 // pred_check
          %p375 = pneg %p374
        $region46: #{multi_head_attention.7} parent=43 // pred_check_branch
          %377 = sbr.rel (%p375) target = $region48
        $region47: #{multi_head_attention.7} parent=43 // pred_region
          %vm378 = vcmask 7168
          %379 = vst.msk [vmem:[#allocation2] sm:$0xff] %vm378, -inf
          %380 = vst.msk [vmem:[#allocation2 + $0x8] sm:$0xff] %vm378, -inf
          %381 = vst.msk [vmem:[#allocation2 + $0x10] sm:$0xff] %vm378, -inf
          %382 = vst.msk [vmem:[#allocation2 + $0x18] sm:$0xff] %vm378, -inf
          %383 = vst.msk [vmem:[#allocation3] sm:$0xff] %vm378, 0.0
          %384 = vst.msk [vmem:[#allocation3 + $0x8] sm:$0xff] %vm378, 0.0
          %385 = vst.msk [vmem:[#allocation3 + $0x10] sm:$0xff] %vm378, 0.0
          %386 = vst.msk [vmem:[#allocation3 + $0x18] sm:$0xff] %vm378, 0.0
          %vm387 = vcmask 261120
          %388 = vst.msk [vmem:[#allocation4] sm:$0xff] %vm387, 0.0
        $region48: #{multi_head_attention.7} parent=43 // pred_fallthru
          _
        %v389 = vld [vmem:[%s373] sm:$0xff]
        %vm390 = vcmp.ne.f32.partialorder %v389, 0.0
        %v391 = vld [vmem:[%s349] sm:$0xff]
        %v392 = vld [vmem:[%s356] sm:$0xff]
        %v393 = vld [vmem:[%s363] sm:$0xff]
        %vm394 = vcmask 64512
        %v396 = vsel %vm394, %v391, 0
        %v399 = vsel %vm394, %v392, 0
        %401 = vmatprep.subr.mxu0 0.0
        %402 = vmatpush1.xpose.msra.mxu0 0.0
        %403 = vmatprep.subr.mxu0 0.0
        %404 = vmatpush1.xpose.msra.mxu0 0.0
        %405 = vmatprep.subr.mxu0 0.0
        %406 = vmatpush1.xpose.msra.mxu0 0.0
        %407 = vmatprep.subr.mxu0 0.0
        %408 = vmatpush1.xpose.msra.mxu0 0.0
        %409 = vmatprep.subr.mxu0 0.0
        %410 = vmatpush1.xpose.msra.mxu0 0.0
        %411 = vmatprep.subr.mxu0 0.0
        %412 = vmatpush1.xpose.msra.mxu0 0.0
        %413 = vmatprep.subr.mxu0 0.0
        %414 = vmatpush1.xpose.msra.mxu0 0.0
        %415 = vmatprep.subr.mxu0 0.0
        %416 = vmatpush1.xpose.msra.mxu0 0.0
        %417 = vmatprep.subr.mxu0 0.0
        %418 = vmatpush1.xpose.msra.mxu0 0.0
        %419 = vmatprep.subr.mxu0 0.0
        %420 = vmatpush1.xpose.msra.mxu0 0.0
        %421 = vmatprep.subr.mxu0 0.0
        %422 = vmatpush1.xpose.msra.mxu0 0.0
        %423 = vmatprep.subr.mxu0 0.0
        %424 = vmatpush1.xpose.msra.mxu0 0.0
        %425 = vmatprep.subr.mxu0 0.0
        %426 = vmatpush1.xpose.msra.mxu0 0.0
        %427 = vmatprep.subr.mxu0 0.0
        %428 = vmatpush1.xpose.msra.mxu0 0.0
        %429 = vmatprep.subr.mxu0 0.0
        %430 = vmatpush1.xpose.msra.mxu0 0.0
        %431 = vmatprep.subr.mxu0 0.0
        %432 = vmatpush1.xpose.msra.mxu0 %v399
        %433 = vmatprep.subr.mxu0 0.0
        %434 = vmatpush2.xpose.msra.mxu0 0.0
        %435 = vmatprep.subr.mxu0 0.0
        %436 = vmatpush2.xpose.msra.mxu0 0.0
        %437 = vmatprep.subr.mxu0 0.0
        %438 = vmatpush2.xpose.msra.mxu0 0.0
        %439 = vmatprep.subr.mxu0 0.0
        %440 = vmatpush2.xpose.msra.mxu0 0.0
        %441 = vmatprep.subr.mxu0 0.0
        %442 = vmatpush2.xpose.msra.mxu0 0.0
        %443 = vmatprep.subr.mxu0 0.0
        %444 = vmatpush2.xpose.msra.mxu0 0.0
        %445 = vmatprep.subr.mxu0 0.0
        %446 = vmatpush2.xpose.msra.mxu0 0.0
        %447 = vmatprep.subr.mxu0 0.0
        %448 = vmatpush2.xpose.msra.mxu0 0.0
        %449 = vmatprep.subr.mxu0 0.0
        %450 = vmatpush2.xpose.msra.mxu0 0.0
        %451 = vmatprep.subr.mxu0 0.0
        %452 = vmatpush2.xpose.msra.mxu0 0.0
        %453 = vmatprep.subr.mxu0 0.0
        %454 = vmatpush2.xpose.msra.mxu0 0.0
        %455 = vmatprep.subr.mxu0 0.0
        %456 = vmatpush2.xpose.msra.mxu0 0.0
        %457 = vmatprep.subr.mxu0 0.0
        %458 = vmatpush2.xpose.msra.mxu0 0.0
        %459 = vmatprep.subr.mxu0 0.0
        %460 = vmatpush2.xpose.msra.mxu0 0.0
        %461 = vmatprep.subr.mxu0 0.0
        %462 = vmatpush2.xpose.msra.mxu0 0.0
        %463 = vmatprep.subr.mxu0 0.0
        %464 = vmatpush2.xpose.msra.mxu0 0.0
        %465 = vmatprep.mubr.f32.mxu0 0.0
        %466 = vmatmul.mubr.f32.gmra.mxu0 %v396
        %v467 = vpop.f32.mrf.mxu0
        %v468 = vadd.f32 0.0, %v467
        %v469 = vpop.f32.mrf.mxu0
        %470 = vdwg.mxu0
        %v471 = vmul.f32 %v468, 0.35355338
        %v472 = vsel %vm390, %v471, -1e+09
        %v473 = vld [vmem:[#allocation2] sm:$0xff]
        %v474 = vsel %vm394, %v472, -inf
        %475 = vmax.xlane.f32.xlu0 %v474
        %v476 = vpop.xlane.xlu0 %475
        %v477 = vmax.f32 %v473, %v476
        %v478 = vsub.f32 %v473, %v477
        %v479 = vmul.f32 %v478, 1.442695
        %v480 = vpow.pop %v479
        %482 = vset.pattern.permute.xlu0 0
        %483 = vperm.xlu0 %482, %v477
        %v484 = vpop.permute.xlu0 %483
        %v486 = vsub.f32 %v472, %v484
        %v487 = vmul.f32 %v486, 1.442695
        %v488 = vpow.pop %v487
        %v489 = vld [vmem:[#allocation3] sm:$0xff]
        %v490 = vmul.f32 %v480, %v489
        %v491 = vsel %vm394, %v488, 0.0
        %492 = vadd.xlane.f32.xlu0 %v491
        %v493 = vpop.xlane.xlu0 %492
        %v494 = vadd.f32 %v490, %v493
        %vm495 = vcmask 7168
        %496 = vst.msk [vmem:[#allocation3] sm:$0xff] %vm495, %v494
        %v498 = vsel %vm394, %v488, 0
        %500 = vmatprep.subr.mxu0 0.0
        %501 = vmatpush1.msra.mxu0 0.0
        %502 = vmatprep.subr.mxu0 0.0
        %503 = vmatpush1.msra.mxu0 0.0
        %504 = vmatprep.subr.mxu0 0.0
        %505 = vmatpush1.msra.mxu0 0.0
        %506 = vmatprep.subr.mxu0 0.0
        %507 = vmatpush1.msra.mxu0 0.0
        %508 = vmatprep.subr.mxu0 0.0
        %509 = vmatpush1.msra.mxu0 0.0
        %510 = vmatprep.subr.mxu0 0.0
        %511 = vmatpush1.msra.mxu0 0.0
        %512 = vmatprep.subr.mxu0 0.0
        %513 = vmatpush1.msra.mxu0 0.0
        %514 = vmatprep.subr.mxu0 0.0
        %515 = vmatpush1.msra.mxu0 0.0
        %516 = vmatprep.subr.mxu0 0.0
        %517 = vmatpush1.msra.mxu0 0.0
        %518 = vmatprep.subr.mxu0 0.0
        %519 = vmatpush1.msra.mxu0 0.0
        %520 = vmatprep.subr.mxu0 0.0
        %521 = vmatpush1.msra.mxu0 0.0
        %522 = vmatprep.subr.mxu0 0.0
        %523 = vmatpush1.msra.mxu0 0.0
        %524 = vmatprep.subr.mxu0 0.0
        %525 = vmatpush1.msra.mxu0 0.0
        %526 = vmatprep.subr.mxu0 0.0
        %527 = vmatpush1.msra.mxu0 0.0
        %528 = vmatprep.subr.mxu0 0.0
        %529 = vmatpush1.msra.mxu0 0.0
        %530 = vmatprep.subr.mxu0 0.0
        %531 = vmatpush1.msra.mxu0 %v393
        %532 = vmatprep.subr.mxu0 0.0
        %533 = vmatpush2.msra.mxu0 0.0
        %534 = vmatprep.subr.mxu0 0.0
        %535 = vmatpush2.msra.mxu0 0.0
        %536 = vmatprep.subr.mxu0 0.0
        %537 = vmatpush2.msra.mxu0 0.0
        %538 = vmatprep.subr.mxu0 0.0
        %539 = vmatpush2.msra.mxu0 0.0
        %540 = vmatprep.subr.mxu0 0.0
        %541 = vmatpush2.msra.mxu0 0.0
        %542 = vmatprep.subr.mxu0 0.0
        %543 = vmatpush2.msra.mxu0 0.0
        %544 = vmatprep.subr.mxu0 0.0
        %545 = vmatpush2.msra.mxu0 0.0
        %546 = vmatprep.subr.mxu0 0.0
        %547 = vmatpush2.msra.mxu0 0.0
        %548 = vmatprep.subr.mxu0 0.0
        %549 = vmatpush2.msra.mxu0 0.0
        %550 = vmatprep.subr.mxu0 0.0
        %551 = vmatpush2.msra.mxu0 0.0
        %552 = vmatprep.subr.mxu0 0.0
        %553 = vmatpush2.msra.mxu0 0.0
        %554 = vmatprep.subr.mxu0 0.0
        %555 = vmatpush2.msra.mxu0 0.0
        %556 = vmatprep.subr.mxu0 0.0
        %557 = vmatpush2.msra.mxu0 0.0
        %558 = vmatprep.subr.mxu0 0.0
        %559 = vmatpush2.msra.mxu0 0.0
        %560 = vmatprep.subr.mxu0 0.0
        %561 = vmatpush2.msra.mxu0 0.0
        %562 = vmatprep.subr.mxu0 0.0
        %563 = vmatpush2.msra.mxu0 0.0
        %564 = vmatprep.mubr.f32.mxu0 0.0
        %565 = vmatmul.mubr.f32.gmra.mxu0 %v498
        %v566 = vpop.f32.mrf.mxu0
        %v567 = vadd.f32 0.0, %v566
        %v568 = vpop.f32.mrf.mxu0
        %569 = vdwg.mxu0
        %v570 = vld [vmem:[#allocation4] sm:$0xff]
        %572 = vset.pattern.permute.xlu0 0
        %573 = vperm.xlu0 %572, %v480
        %v574 = vpop.permute.xlu0 %573
        %v576 = vmul.f32 %v574, %v570
        %v577 = vadd.f32 %v576, %v567
        %578 = vst.msk [vmem:[#allocation4] sm:$0xff] %vm394, %v577
        %579 = vst.msk [vmem:[#allocation2] sm:$0xff] %vm495, %v477
        %v580 = vld [vmem:[%s349] sm:$0xff]
        %v581 = vld [vmem:[%s356] sm:$0xff]
        %v582 = vld [vmem:[%s363] sm:$0xff]
        %584 = vrot.lane.b32.xlu0 %v580, 120
        %v585 = vpop.permute.xlu0 %584
        %587 = vrot.lane.b32.xlu0 %v581, 120
        %v588 = vpop.permute.xlu0 %587
        %v589 = vsel %vm394, %v585, 0
        %v591 = vsel %vm394, %v588, 0
        %593 = vmatprep.subr.mxu0 0.0
        %594 = vmatpush1.xpose.msra.mxu0 0.0
        %595 = vmatprep.subr.mxu0 0.0
        %596 = vmatpush1.xpose.msra.mxu0 0.0
        %597 = vmatprep.subr.mxu0 0.0
        %598 = vmatpush1.xpose.msra.mxu0 0.0
        %599 = vmatprep.subr.mxu0 0.0
        %600 = vmatpush1.xpose.msra.mxu0 0.0
        %601 = vmatprep.subr.mxu0 0.0
        %602 = vmatpush1.xpose.msra.mxu0 0.0
        %603 = vmatprep.subr.mxu0 0.0
        %604 = vmatpush1.xpose.msra.mxu0 0.0
        %605 = vmatprep.subr.mxu0 0.0
        %606 = vmatpush1.xpose.msra.mxu0 0.0
        %607 = vmatprep.subr.mxu0 0.0
        %608 = vmatpush1.xpose.msra.mxu0 0.0
        %609 = vmatprep.subr.mxu0 0.0
        %610 = vmatpush1.xpose.msra.mxu0 0.0
        %611 = vmatprep.subr.mxu0 0.0
        %612 = vmatpush1.xpose.msra.mxu0 0.0
        %613 = vmatprep.subr.mxu0 0.0
        %614 = vmatpush1.xpose.msra.mxu0 0.0
        %615 = vmatprep.subr.mxu0 0.0
        %616 = vmatpush1.xpose.msra.mxu0 0.0
        %617 = vmatprep.subr.mxu0 0.0
        %618 = vmatpush1.xpose.msra.mxu0 0.0
        %619 = vmatprep.subr.mxu0 0.0
        %620 = vmatpush1.xpose.msra.mxu0 0.0
        %621 = vmatprep.subr.mxu0 0.0
        %622 = vmatpush1.xpose.msra.mxu0 0.0
        %623 = vmatprep.subr.mxu0 0.0
        %624 = vmatpush1.xpose.msra.mxu0 %v591
        %625 = vmatprep.subr.mxu0 0.0
        %626 = vmatpush2.xpose.msra.mxu0 0.0
        %627 = vmatprep.subr.mxu0 0.0
        %628 = vmatpush2.xpose.msra.mxu0 0.0
        %629 = vmatprep.subr.mxu0 0.0
        %630 = vmatpush2.xpose.msra.mxu0 0.0
        %631 = vmatprep.subr.mxu0 0.0
        %632 = vmatpush2.xpose.msra.mxu0 0.0
        %633 = vmatprep.subr.mxu0 0.0
        %634 = vmatpush2.xpose.msra.mxu0 0.0
        %635 = vmatprep.subr.mxu0 0.0
        %636 = vmatpush2.xpose.msra.mxu0 0.0
        %637 = vmatprep.subr.mxu0 0.0
        %638 = vmatpush2.xpose.msra.mxu0 0.0
        %639 = vmatprep.subr.mxu0 0.0
        %640 = vmatpush2.xpose.msra.mxu0 0.0
        %641 = vmatprep.subr.mxu0 0.0
        %642 = vmatpush2.xpose.msra.mxu0 0.0
        %643 = vmatprep.subr.mxu0 0.0
        %644 = vmatpush2.xpose.msra.mxu0 0.0
        %645 = vmatprep.subr.mxu0 0.0
        %646 = vmatpush2.xpose.msra.mxu0 0.0
        %647 = vmatprep.subr.mxu0 0.0
        %648 = vmatpush2.xpose.msra.mxu0 0.0
        %649 = vmatprep.subr.mxu0 0.0
        %650 = vmatpush2.xpose.msra.mxu0 0.0
        %651 = vmatprep.subr.mxu0 0.0
        %652 = vmatpush2.xpose.msra.mxu0 0.0
        %653 = vmatprep.subr.mxu0 0.0
        %654 = vmatpush2.xpose.msra.mxu0 0.0
        %655 = vmatprep.subr.mxu0 0.0
        %656 = vmatpush2.xpose.msra.mxu0 0.0
        %657 = vmatprep.mubr.f32.mxu0 0.0
        %658 = vmatmul.mubr.f32.gmra.mxu0 %v589
        %v659 = vpop.f32.mrf.mxu0
        %v660 = vadd.f32 0.0, %v659
        %v661 = vpop.f32.mrf.mxu0
        %662 = vdwg.mxu0
        %v663 = vmul.f32 %v660, 0.35355338
        %v664 = vsel %vm390, %v663, -1e+09
        %s665 = scalar_lea.vmem [#allocation2], 8
        %v666 = vld [vmem:[%s665] sm:$0xff]
        %v667 = vsel %vm394, %v664, -inf
        %668 = vmax.xlane.f32.xlu0 %v667
        %v669 = vpop.xlane.xlu0 %668
        %v670 = vmax.f32 %v666, %v669
        %v671 = vsub.f32 %v666, %v670
        %v672 = vmul.f32 %v671, 1.442695
        %v673 = vpow.pop %v672
        %675 = vset.pattern.permute.xlu0 0
        %676 = vperm.xlu0 %675, %v670
        %v677 = vpop.permute.xlu0 %676
        %v679 = vsub.f32 %v664, %v677
        %v680 = vmul.f32 %v679, 1.442695
        %v681 = vpow.pop %v680
        %s682 = scalar_lea.vmem [#allocation3], 8
        %v683 = vld [vmem:[%s682] sm:$0xff]
        %v684 = vmul.f32 %v673, %v683
        %v685 = vsel %vm394, %v681, 0.0
        %686 = vadd.xlane.f32.xlu0 %v685
        %v687 = vpop.xlane.xlu0 %686
        %v688 = vadd.f32 %v684, %v687
        %689 = vst.msk [vmem:[%s682] sm:$0xff] %vm495, %v688
        %691 = vrot.lane.b32.xlu0 %v582, 120
        %v692 = vpop.permute.xlu0 %691
        %v695 = vsel %vm394, %v681, 0
        %697 = vmatprep.subr.mxu0 0.0
        %698 = vmatpush1.msra.mxu0 0.0
        %699 = vmatprep.subr.mxu0 0.0
        %700 = vmatpush1.msra.mxu0 0.0
        %701 = vmatprep.subr.mxu0 0.0
        %702 = vmatpush1.msra.mxu0 0.0
        %703 = vmatprep.subr.mxu0 0.0
        %704 = vmatpush1.msra.mxu0 0.0
        %705 = vmatprep.subr.mxu0 0.0
        %706 = vmatpush1.msra.mxu0 0.0
        %707 = vmatprep.subr.mxu0 0.0
        %708 = vmatpush1.msra.mxu0 0.0
        %709 = vmatprep.subr.mxu0 0.0
        %710 = vmatpush1.msra.mxu0 0.0
        %711 = vmatprep.subr.mxu0 0.0
        %712 = vmatpush1.msra.mxu0 0.0
        %713 = vmatprep.subr.mxu0 0.0
        %714 = vmatpush1.msra.mxu0 0.0
        %715 = vmatprep.subr.mxu0 0.0
        %716 = vmatpush1.msra.mxu0 0.0
        %717 = vmatprep.subr.mxu0 0.0
        %718 = vmatpush1.msra.mxu0 0.0
        %719 = vmatprep.subr.mxu0 0.0
        %720 = vmatpush1.msra.mxu0 0.0
        %721 = vmatprep.subr.mxu0 0.0
        %722 = vmatpush1.msra.mxu0 0.0
        %723 = vmatprep.subr.mxu0 0.0
        %724 = vmatpush1.msra.mxu0 0.0
        %725 = vmatprep.subr.mxu0 0.0
        %726 = vmatpush1.msra.mxu0 0.0
        %727 = vmatprep.subr.mxu0 0.0
        %728 = vmatpush1.msra.mxu0 %v692
        %729 = vmatprep.subr.mxu0 0.0
        %730 = vmatpush2.msra.mxu0 0.0
        %731 = vmatprep.subr.mxu0 0.0
        %732 = vmatpush2.msra.mxu0 0.0
        %733 = vmatprep.subr.mxu0 0.0
        %734 = vmatpush2.msra.mxu0 0.0
        %735 = vmatprep.subr.mxu0 0.0
        %736 = vmatpush2.msra.mxu0 0.0
        %737 = vmatprep.subr.mxu0 0.0
        %738 = vmatpush2.msra.mxu0 0.0
        %739 = vmatprep.subr.mxu0 0.0
        %740 = vmatpush2.msra.mxu0 0.0
        %741 = vmatprep.subr.mxu0 0.0
        %742 = vmatpush2.msra.mxu0 0.0
        %743 = vmatprep.subr.mxu0 0.0
        %744 = vmatpush2.msra.mxu0 0.0
        %745 = vmatprep.subr.mxu0 0.0
        %746 = vmatpush2.msra.mxu0 0.0
        %747 = vmatprep.subr.mxu0 0.0
        %748 = vmatpush2.msra.mxu0 0.0
        %749 = vmatprep.subr.mxu0 0.0
        %750 = vmatpush2.msra.mxu0 0.0
        %751 = vmatprep.subr.mxu0 0.0
        %752 = vmatpush2.msra.mxu0 0.0
        %753 = vmatprep.subr.mxu0 0.0
        %754 = vmatpush2.msra.mxu0 0.0
        %755 = vmatprep.subr.mxu0 0.0
        %756 = vmatpush2.msra.mxu0 0.0
        %757 = vmatprep.subr.mxu0 0.0
        %758 = vmatpush2.msra.mxu0 0.0
        %759 = vmatprep.subr.mxu0 0.0
        %760 = vmatpush2.msra.mxu0 0.0
        %761 = vmatprep.mubr.f32.mxu0 0.0
        %762 = vmatmul.mubr.f32.gmra.mxu0 %v695
        %v763 = vpop.f32.mrf.mxu0
        %v764 = vadd.f32 0.0, %v763
        %v765 = vpop.f32.mrf.mxu0
        %766 = vdwg.mxu0
        %v767 = vld [vmem:[#allocation4] sm:$0xff]
        %769 = vset.pattern.permute.xlu0 0
        %770 = vperm.xlu0 %769, %v673
        %v771 = vpop.permute.xlu0 %770
        %v773 = vmul.f32 %v771, %v767
        %775 = vrot.lane.b32.xlu0 %v764, 8
        %v776 = vpop.permute.xlu0 %775
        %v778 = vadd.f32 %v773, %v776
        %vm779 = vcmask 130112
        %780 = vst.msk [vmem:[#allocation4] sm:$0xff] %vm779, %v778
        %781 = vst.msk [vmem:[%s665] sm:$0xff] %vm495, %v670
        %v782 = vld [vmem:[%s349] sm:$0xff]
        %v783 = vld [vmem:[%s356] sm:$0xff]
        %v784 = vld [vmem:[%s363] sm:$0xff]
        %786 = vrot.lane.b32.xlu0 %v782, 112
        %v787 = vpop.permute.xlu0 %786
        %789 = vrot.lane.b32.xlu0 %v783, 112
        %v790 = vpop.permute.xlu0 %789
        %v791 = vsel %vm394, %v787, 0
        %v793 = vsel %vm394, %v790, 0
        %795 = vmatprep.subr.mxu0 0.0
        %796 = vmatpush1.xpose.msra.mxu0 0.0
        %797 = vmatprep.subr.mxu0 0.0
        %798 = vmatpush1.xpose.msra.mxu0 0.0
        %799 = vmatprep.subr.mxu0 0.0
        %800 = vmatpush1.xpose.msra.mxu0 0.0
        %801 = vmatprep.subr.mxu0 0.0
        %802 = vmatpush1.xpose.msra.mxu0 0.0
        %803 = vmatprep.subr.mxu0 0.0
        %804 = vmatpush1.xpose.msra.mxu0 0.0
        %805 = vmatprep.subr.mxu0 0.0
        %806 = vmatpush1.xpose.msra.mxu0 0.0
        %807 = vmatprep.subr.mxu0 0.0
        %808 = vmatpush1.xpose.msra.mxu0 0.0
        %809 = vmatprep.subr.mxu0 0.0
        %810 = vmatpush1.xpose.msra.mxu0 0.0
        %811 = vmatprep.subr.mxu0 0.0
        %812 = vmatpush1.xpose.msra.mxu0 0.0
        %813 = vmatprep.subr.mxu0 0.0
        %814 = vmatpush1.xpose.msra.mxu0 0.0
        %815 = vmatprep.subr.mxu0 0.0
        %816 = vmatpush1.xpose.msra.mxu0 0.0
        %817 = vmatprep.subr.mxu0 0.0
        %818 = vmatpush1.xpose.msra.mxu0 0.0
        %819 = vmatprep.subr.mxu0 0.0
        %820 = vmatpush1.xpose.msra.mxu0 0.0
        %821 = vmatprep.subr.mxu0 0.0
        %822 = vmatpush1.xpose.msra.mxu0 0.0
        %823 = vmatprep.subr.mxu0 0.0
        %824 = vmatpush1.xpose.msra.mxu0 0.0
        %825 = vmatprep.subr.mxu0 0.0
        %826 = vmatpush1.xpose.msra.mxu0 %v793
        %827 = vmatprep.subr.mxu0 0.0
        %828 = vmatpush2.xpose.msra.mxu0 0.0
        %829 = vmatprep.subr.mxu0 0.0
        %830 = vmatpush2.xpose.msra.mxu0 0.0
        %831 = vmatprep.subr.mxu0 0.0
        %832 = vmatpush2.xpose.msra.mxu0 0.0
        %833 = vmatprep.subr.mxu0 0.0
        %834 = vmatpush2.xpose.msra.mxu0 0.0
        %835 = vmatprep.subr.mxu0 0.0
        %836 = vmatpush2.xpose.msra.mxu0 0.0
        %837 = vmatprep.subr.mxu0 0.0
        %838 = vmatpush2.xpose.msra.mxu0 0.0
        %839 = vmatprep.subr.mxu0 0.0
        %840 = vmatpush2.xpose.msra.mxu0 0.0
        %841 = vmatprep.subr.mxu0 0.0
        %842 = vmatpush2.xpose.msra.mxu0 0.0
        %843 = vmatprep.subr.mxu0 0.0
        %844 = vmatpush2.xpose.msra.mxu0 0.0
        %845 = vmatprep.subr.mxu0 0.0
        %846 = vmatpush2.xpose.msra.mxu0 0.0
        %847 = vmatprep.subr.mxu0 0.0
        %848 = vmatpush2.xpose.msra.mxu0 0.0
        %849 = vmatprep.subr.mxu0 0.0
        %850 = vmatpush2.xpose.msra.mxu0 0.0
        %851 = vmatprep.subr.mxu0 0.0
        %852 = vmatpush2.xpose.msra.mxu0 0.0
        %853 = vmatprep.subr.mxu0 0.0
        %854 = vmatpush2.xpose.msra.mxu0 0.0
        %855 = vmatprep.subr.mxu0 0.0
        %856 = vmatpush2.xpose.msra.mxu0 0.0
        %857 = vmatprep.subr.mxu0 0.0
        %858 = vmatpush2.xpose.msra.mxu0 0.0
        %859 = vmatprep.mubr.f32.mxu0 0.0
        %860 = vmatmul.mubr.f32.gmra.mxu0 %v791
        %v861 = vpop.f32.mrf.mxu0
        %v862 = vadd.f32 0.0, %v861
        %v863 = vpop.f32.mrf.mxu0
        %864 = vdwg.mxu0
        %v865 = vmul.f32 %v862, 0.35355338
        %v866 = vsel %vm390, %v865, -1e+09
        %s867 = scalar_lea.vmem [#allocation2], 16
        %v868 = vld [vmem:[%s867] sm:$0xff]
        %v869 = vsel %vm394, %v866, -inf
        %870 = vmax.xlane.f32.xlu0 %v869
        %v871 = vpop.xlane.xlu0 %870
        %v872 = vmax.f32 %v868, %v871
        %v873 = vsub.f32 %v868, %v872
        %v874 = vmul.f32 %v873, 1.442695
        %v875 = vpow.pop %v874
        %877 = vset.pattern.permute.xlu0 0
        %878 = vperm.xlu0 %877, %v872
        %v879 = vpop.permute.xlu0 %878
        %v881 = vsub.f32 %v866, %v879
        %v882 = vmul.f32 %v881, 1.442695
        %v883 = vpow.pop %v882
        %s884 = scalar_lea.vmem [#allocation3], 16
        %v885 = vld [vmem:[%s884] sm:$0xff]
        %v886 = vmul.f32 %v875, %v885
        %v887 = vsel %vm394, %v883, 0.0
        %888 = vadd.xlane.f32.xlu0 %v887
        %v889 = vpop.xlane.xlu0 %888
        %v890 = vadd.f32 %v886, %v889
        %891 = vst.msk [vmem:[%s884] sm:$0xff] %vm495, %v890
        %893 = vrot.lane.b32.xlu0 %v784, 112
        %v894 = vpop.permute.xlu0 %893
        %v897 = vsel %vm394, %v883, 0
        %899 = vmatprep.subr.mxu0 0.0
        %900 = vmatpush1.msra.mxu0 0.0
        %901 = vmatprep.subr.mxu0 0.0
        %902 = vmatpush1.msra.mxu0 0.0
        %903 = vmatprep.subr.mxu0 0.0
        %904 = vmatpush1.msra.mxu0 0.0
        %905 = vmatprep.subr.mxu0 0.0
        %906 = vmatpush1.msra.mxu0 0.0
        %907 = vmatprep.subr.mxu0 0.0
        %908 = vmatpush1.msra.mxu0 0.0
        %909 = vmatprep.subr.mxu0 0.0
        %910 = vmatpush1.msra.mxu0 0.0
        %911 = vmatprep.subr.mxu0 0.0
        %912 = vmatpush1.msra.mxu0 0.0
        %913 = vmatprep.subr.mxu0 0.0
        %914 = vmatpush1.msra.mxu0 0.0
        %915 = vmatprep.subr.mxu0 0.0
        %916 = vmatpush1.msra.mxu0 0.0
        %917 = vmatprep.subr.mxu0 0.0
        %918 = vmatpush1.msra.mxu0 0.0
        %919 = vmatprep.subr.mxu0 0.0
        %920 = vmatpush1.msra.mxu0 0.0
        %921 = vmatprep.subr.mxu0 0.0
        %922 = vmatpush1.msra.mxu0 0.0
        %923 = vmatprep.subr.mxu0 0.0
        %924 = vmatpush1.msra.mxu0 0.0
        %925 = vmatprep.subr.mxu0 0.0
        %926 = vmatpush1.msra.mxu0 0.0
        %927 = vmatprep.subr.mxu0 0.0
        %928 = vmatpush1.msra.mxu0 0.0
        %929 = vmatprep.subr.mxu0 0.0
        %930 = vmatpush1.msra.mxu0 %v894
        %931 = vmatprep.subr.mxu0 0.0
        %932 = vmatpush2.msra.mxu0 0.0
        %933 = vmatprep.subr.mxu0 0.0
        %934 = vmatpush2.msra.mxu0 0.0
        %935 = vmatprep.subr.mxu0 0.0
        %936 = vmatpush2.msra.mxu0 0.0
        %937 = vmatprep.subr.mxu0 0.0
        %938 = vmatpush2.msra.mxu0 0.0
        %939 = vmatprep.subr.mxu0 0.0
        %940 = vmatpush2.msra.mxu0 0.0
        %941 = vmatprep.subr.mxu0 0.0
        %942 = vmatpush2.msra.mxu0 0.0
        %943 = vmatprep.subr.mxu0 0.0
        %944 = vmatpush2.msra.mxu0 0.0
        %945 = vmatprep.subr.mxu0 0.0
        %946 = vmatpush2.msra.mxu0 0.0
        %947 = vmatprep.subr.mxu0 0.0
        %948 = vmatpush2.msra.mxu0 0.0
        %949 = vmatprep.subr.mxu0 0.0
        %950 = vmatpush2.msra.mxu0 0.0
        %951 = vmatprep.subr.mxu0 0.0
        %952 = vmatpush2.msra.mxu0 0.0
        %953 = vmatprep.subr.mxu0 0.0
        %954 = vmatpush2.msra.mxu0 0.0
        %955 = vmatprep.subr.mxu0 0.0
        %956 = vmatpush2.msra.mxu0 0.0
        %957 = vmatprep.subr.mxu0 0.0
        %958 = vmatpush2.msra.mxu0 0.0
        %959 = vmatprep.subr.mxu0 0.0
        %960 = vmatpush2.msra.mxu0 0.0
        %961 = vmatprep.subr.mxu0 0.0
        %962 = vmatpush2.msra.mxu0 0.0
        %963 = vmatprep.mubr.f32.mxu0 0.0
        %964 = vmatmul.mubr.f32.gmra.mxu0 %v897
        %v965 = vpop.f32.mrf.mxu0
        %v966 = vadd.f32 0.0, %v965
        %v967 = vpop.f32.mrf.mxu0
        %968 = vdwg.mxu0
        %v969 = vld [vmem:[#allocation4] sm:$0xff]
        %971 = vset.pattern.permute.xlu0 0
        %972 = vperm.xlu0 %971, %v875
        %v973 = vpop.permute.xlu0 %972
        %v975 = vmul.f32 %v973, %v969
        %977 = vrot.lane.b32.xlu0 %v966, 16
        %v978 = vpop.permute.xlu0 %977
        %v980 = vadd.f32 %v975, %v978
        %vm981 = vcmask 195712
        %982 = vst.msk [vmem:[#allocation4] sm:$0xff] %vm981, %v980
        %983 = vst.msk [vmem:[%s867] sm:$0xff] %vm495, %v872
        %v984 = vld [vmem:[%s349] sm:$0xff]
        %v985 = vld [vmem:[%s356] sm:$0xff]
        %v986 = vld [vmem:[%s363] sm:$0xff]
        %988 = vrot.lane.b32.xlu0 %v984, 104
        %v989 = vpop.permute.xlu0 %988
        %991 = vrot.lane.b32.xlu0 %v985, 104
        %v992 = vpop.permute.xlu0 %991
        %v993 = vsel %vm394, %v989, 0
        %v995 = vsel %vm394, %v992, 0
        %997 = vmatprep.subr.mxu0 0.0
        %998 = vmatpush1.xpose.msra.mxu0 0.0
        %999 = vmatprep.subr.mxu0 0.0
        %1000 = vmatpush1.xpose.msra.mxu0 0.0
        %1001 = vmatprep.subr.mxu0 0.0
        %1002 = vmatpush1.xpose.msra.mxu0 0.0
        %1003 = vmatprep.subr.mxu0 0.0
        %1004 = vmatpush1.xpose.msra.mxu0 0.0
        %1005 = vmatprep.subr.mxu0 0.0
        %1006 = vmatpush1.xpose.msra.mxu0 0.0
        %1007 = vmatprep.subr.mxu0 0.0
        %1008 = vmatpush1.xpose.msra.mxu0 0.0
        %1009 = vmatprep.subr.mxu0 0.0
        %1010 = vmatpush1.xpose.msra.mxu0 0.0
        %1011 = vmatprep.subr.mxu0 0.0
        %1012 = vmatpush1.xpose.msra.mxu0 0.0
        %1013 = vmatprep.subr.mxu0 0.0
        %1014 = vmatpush1.xpose.msra.mxu0 0.0
        %1015 = vmatprep.subr.mxu0 0.0
        %1016 = vmatpush1.xpose.msra.mxu0 0.0
        %1017 = vmatprep.subr.mxu0 0.0
        %1018 = vmatpush1.xpose.msra.mxu0 0.0
        %1019 = vmatprep.subr.mxu0 0.0
        %1020 = vmatpush1.xpose.msra.mxu0 0.0
        %1021 = vmatprep.subr.mxu0 0.0
        %1022 = vmatpush1.xpose.msra.mxu0 0.0
        %1023 = vmatprep.subr.mxu0 0.0
        %1024 = vmatpush1.xpose.msra.mxu0 0.0
        %1025 = vmatprep.subr.mxu0 0.0
        %1026 = vmatpush1.xpose.msra.mxu0 0.0
        %1027 = vmatprep.subr.mxu0 0.0
        %1028 = vmatpush1.xpose.msra.mxu0 %v995
        %1029 = vmatprep.subr.mxu0 0.0
        %1030 = vmatpush2.xpose.msra.mxu0 0.0
        %1031 = vmatprep.subr.mxu0 0.0
        %1032 = vmatpush2.xpose.msra.mxu0 0.0
        %1033 = vmatprep.subr.mxu0 0.0
        %1034 = vmatpush2.xpose.msra.mxu0 0.0
        %1035 = vmatprep.subr.mxu0 0.0
        %1036 = vmatpush2.xpose.msra.mxu0 0.0
        %1037 = vmatprep.subr.mxu0 0.0
        %1038 = vmatpush2.xpose.msra.mxu0 0.0
        %1039 = vmatprep.subr.mxu0 0.0
        %1040 = vmatpush2.xpose.msra.mxu0 0.0
        %1041 = vmatprep.subr.mxu0 0.0
        %1042 = vmatpush2.xpose.msra.mxu0 0.0
        %1043 = vmatprep.subr.mxu0 0.0
        %1044 = vmatpush2.xpose.msra.mxu0 0.0
        %1045 = vmatprep.subr.mxu0 0.0
        %1046 = vmatpush2.xpose.msra.mxu0 0.0
        %1047 = vmatprep.subr.mxu0 0.0
        %1048 = vmatpush2.xpose.msra.mxu0 0.0
        %1049 = vmatprep.subr.mxu0 0.0
        %1050 = vmatpush2.xpose.msra.mxu0 0.0
        %1051 = vmatprep.subr.mxu0 0.0
        %1052 = vmatpush2.xpose.msra.mxu0 0.0
        %1053 = vmatprep.subr.mxu0 0.0
        %1054 = vmatpush2.xpose.msra.mxu0 0.0
        %1055 = vmatprep.subr.mxu0 0.0
        %1056 = vmatpush2.xpose.msra.mxu0 0.0
        %1057 = vmatprep.subr.mxu0 0.0
        %1058 = vmatpush2.xpose.msra.mxu0 0.0
        %1059 = vmatprep.subr.mxu0 0.0
        %1060 = vmatpush2.xpose.msra.mxu0 0.0
        %1061 = vmatprep.mubr.f32.mxu0 0.0
        %1062 = vmatmul.mubr.f32.gmra.mxu0 %v993
        %v1063 = vpop.f32.mrf.mxu0
        %v1064 = vadd.f32 0.0, %v1063
        %v1065 = vpop.f32.mrf.mxu0
        %1066 = vdwg.mxu0
        %v1067 = vmul.f32 %v1064, 0.35355338
        %v1068 = vsel %vm390, %v1067, -1e+09
        %s1069 = scalar_lea.vmem [#allocation2], 24
        %v1070 = vld [vmem:[%s1069] sm:$0xff]
        %v1071 = vsel %vm394, %v1068, -inf
        %1072 = vmax.xlane.f32.xlu0 %v1071
        %v1073 = vpop.xlane.xlu0 %1072
        %v1074 = vmax.f32 %v1070, %v1073
        %v1075 = vsub.f32 %v1070, %v1074
        %v1076 = vmul.f32 %v1075, 1.442695
        %v1077 = vpow.pop %v1076
        %1079 = vset.pattern.permute.xlu0 0
        %1080 = vperm.xlu0 %1079, %v1074
        %v1081 = vpop.permute.xlu0 %1080
        %v1083 = vsub.f32 %v1068, %v1081
        %v1084 = vmul.f32 %v1083, 1.442695
        %v1085 = vpow.pop %v1084
        %s1086 = scalar_lea.vmem [#allocation3], 24
        %v1087 = vld [vmem:[%s1086] sm:$0xff]
        %v1088 = vmul.f32 %v1077, %v1087
        %v1089 = vsel %vm394, %v1085, 0.0
        %1090 = vadd.xlane.f32.xlu0 %v1089
        %v1091 = vpop.xlane.xlu0 %1090
        %v1092 = vadd.f32 %v1088, %v1091
        %1093 = vst.msk [vmem:[%s1086] sm:$0xff] %vm495, %v1092
        %1095 = vrot.lane.b32.xlu0 %v986, 104
        %v1096 = vpop.permute.xlu0 %1095
        %v1099 = vsel %vm394, %v1085, 0
        %1101 = vmatprep.subr.mxu0 0.0
        %1102 = vmatpush1.msra.mxu0 0.0
        %1103 = vmatprep.subr.mxu0 0.0
        %1104 = vmatpush1.msra.mxu0 0.0
        %1105 = vmatprep.subr.mxu0 0.0
        %1106 = vmatpush1.msra.mxu0 0.0
        %1107 = vmatprep.subr.mxu0 0.0
        %1108 = vmatpush1.msra.mxu0 0.0
        %1109 = vmatprep.subr.mxu0 0.0
        %1110 = vmatpush1.msra.mxu0 0.0
        %1111 = vmatprep.subr.mxu0 0.0
        %1112 = vmatpush1.msra.mxu0 0.0
        %1113 = vmatprep.subr.mxu0 0.0
        %1114 = vmatpush1.msra.mxu0 0.0
        %1115 = vmatprep.subr.mxu0 0.0
        %1116 = vmatpush1.msra.mxu0 0.0
        %1117 = vmatprep.subr.mxu0 0.0
        %1118 = vmatpush1.msra.mxu0 0.0
        %1119 = vmatprep.subr.mxu0 0.0
        %1120 = vmatpush1.msra.mxu0 0.0
        %1121 = vmatprep.subr.mxu0 0.0
        %1122 = vmatpush1.msra.mxu0 0.0
        %1123 = vmatprep.subr.mxu0 0.0
        %1124 = vmatpush1.msra.mxu0 0.0
        %1125 = vmatprep.subr.mxu0 0.0
        %1126 = vmatpush1.msra.mxu0 0.0
        %1127 = vmatprep.subr.mxu0 0.0
        %1128 = vmatpush1.msra.mxu0 0.0
        %1129 = vmatprep.subr.mxu0 0.0
        %1130 = vmatpush1.msra.mxu0 0.0
        %1131 = vmatprep.subr.mxu0 0.0
        %1132 = vmatpush1.msra.mxu0 %v1096
        %1133 = vmatprep.subr.mxu0 0.0
        %1134 = vmatpush2.msra.mxu0 0.0
        %1135 = vmatprep.subr.mxu0 0.0
        %1136 = vmatpush2.msra.mxu0 0.0
        %1137 = vmatprep.subr.mxu0 0.0
        %1138 = vmatpush2.msra.mxu0 0.0
        %1139 = vmatprep.subr.mxu0 0.0
        %1140 = vmatpush2.msra.mxu0 0.0
        %1141 = vmatprep.subr.mxu0 0.0
        %1142 = vmatpush2.msra.mxu0 0.0
        %1143 = vmatprep.subr.mxu0 0.0
        %1144 = vmatpush2.msra.mxu0 0.0
        %1145 = vmatprep.subr.mxu0 0.0
        %1146 = vmatpush2.msra.mxu0 0.0
        %1147 = vmatprep.subr.mxu0 0.0
        %1148 = vmatpush2.msra.mxu0 0.0
        %1149 = vmatprep.subr.mxu0 0.0
        %1150 = vmatpush2.msra.mxu0 0.0
        %1151 = vmatprep.subr.mxu0 0.0
        %1152 = vmatpush2.msra.mxu0 0.0
        %1153 = vmatprep.subr.mxu0 0.0
        %1154 = vmatpush2.msra.mxu0 0.0
        %1155 = vmatprep.subr.mxu0 0.0
        %1156 = vmatpush2.msra.mxu0 0.0
        %1157 = vmatprep.subr.mxu0 0.0
        %1158 = vmatpush2.msra.mxu0 0.0
        %1159 = vmatprep.subr.mxu0 0.0
        %1160 = vmatpush2.msra.mxu0 0.0
        %1161 = vmatprep.subr.mxu0 0.0
        %1162 = vmatpush2.msra.mxu0 0.0
        %1163 = vmatprep.subr.mxu0 0.0
        %1164 = vmatpush2.msra.mxu0 0.0
        %1165 = vmatprep.mubr.f32.mxu0 0.0
        %1166 = vmatmul.mubr.f32.gmra.mxu0 %v1099
        %v1167 = vpop.f32.mrf.mxu0
        %v1168 = vadd.f32 0.0, %v1167
        %v1169 = vpop.f32.mrf.mxu0
        %1170 = vdwg.mxu0
        %v1171 = vld [vmem:[#allocation4] sm:$0xff]
        %1173 = vset.pattern.permute.xlu0 0
        %1174 = vperm.xlu0 %1173, %v1077
        %v1175 = vpop.permute.xlu0 %1174
        %v1177 = vmul.f32 %v1175, %v1171
        %1179 = vrot.lane.b32.xlu0 %v1168, 24
        %v1180 = vpop.permute.xlu0 %1179
        %v1182 = vadd.f32 %v1177, %v1180
        %vm1183 = vcmask 261312
        %1184 = vst.msk [vmem:[#allocation4] sm:$0xff] %vm1183, %v1182
        %1185 = vst.msk [vmem:[%s1069] sm:$0xff] %vm495, %v1074
        // Predicated region
        $region49: #{multi_head_attention.7} parent=43 // pred_check
          %p1186 = pneg %p374
        $region50: #{multi_head_attention.7} parent=43 // pred_check_branch
          %1188 = sbr.rel (%p1186) target = $region52
        $region51: #{multi_head_attention.7} parent=43 // pred_region
          %v1189 = vld [vmem:[#allocation3] sm:$0xff]
          %v1190 = vrcp.pop %v1189
          %v1191 = vld [vmem:[#allocation4] sm:$0xff]
          %1193 = vset.pattern.permute.xlu0 0
          %1194 = vperm.xlu0 %1193, %v1190
          %v1195 = vpop.permute.xlu0 %1194
          %v1197 = vmul.f32 %v1191, %v1195
          %1198 = vst.msk [vmem:[#allocation4] sm:$0xff] %vm394, %v1197
          %v1199 = vld [vmem:[%s682] sm:$0xff]
          %v1200 = vrcp.pop %v1199
          %v1201 = vld [vmem:[#allocation4] sm:$0xff]
          %1203 = vset.pattern.permute.xlu0 0
          %1204 = vperm.xlu0 %1203, %v1200
          %v1205 = vpop.permute.xlu0 %1204
          %v1207 = vmul.f32 %v1201, %v1205
          %1208 = vst.msk [vmem:[#allocation4] sm:$0xff] %vm779, %v1207
          %v1209 = vld [vmem:[%s884] sm:$0xff]
          %v1210 = vrcp.pop %v1209
          %v1211 = vld [vmem:[#allocation4] sm:$0xff]
          %1213 = vset.pattern.permute.xlu0 0
          %1214 = vperm.xlu0 %1213, %v1210
          %v1215 = vpop.permute.xlu0 %1214
          %v1217 = vmul.f32 %v1211, %v1215
          %1218 = vst.msk [vmem:[#allocation4] sm:$0xff] %vm981, %v1217
          %v1219 = vld [vmem:[%s1086] sm:$0xff]
          %v1220 = vrcp.pop %v1219
          %v1221 = vld [vmem:[#allocation4] sm:$0xff]
          %1223 = vset.pattern.permute.xlu0 0
          %1224 = vperm.xlu0 %1223, %v1220
          %v1225 = vpop.permute.xlu0 %1224
          %v1227 = vmul.f32 %v1221, %v1225
          %1228 = vst.msk [vmem:[#allocation4] sm:$0xff] %vm1183, %v1227
          %v1229 = vld [vmem:[#allocation4] sm:$0xff]
          %v1230 = vld [vmem:[%s4] sm:$0xff]
          %v1231 = vld [vmem:[%s4 + $0x8] sm:$0xff]
          %v1232 = vld [vmem:[%s4 + $0x10] sm:$0xff]
          %v1233 = vld [vmem:[%s4 + $0x18] sm:$0xff]
          %v1234 = vld [vmem:[%s5] sm:$0x1]
          %v1236 = vlaneseq
          %v1237 = vshrl.u32 %v1236, 7
          %v1238 = vsub.s32 0, %v1237
          %v1239 = vrot.slane %v1234, %v1238
          %vm1241 = vcmask 261120
          %v1243 = vsel %vm1241, %v1229, 0
          %1245 = vmatprep.subr.mxu0 0.0
          %1246 = vmatpush1.msra.mxu0 0.0
          %1247 = vmatprep.subr.mxu0 0.0
          %1248 = vmatpush1.msra.mxu0 0.0
          %1249 = vmatprep.subr.mxu0 0.0
          %1250 = vmatpush1.msra.mxu0 0.0
          %1251 = vmatprep.subr.mxu0 0.0
          %1252 = vmatpush1.msra.mxu0 0.0
          %1253 = vmatprep.subr.mxu0 0.0
          %1254 = vmatpush1.msra.mxu0 0.0
          %1255 = vmatprep.subr.mxu0 0.0
          %1256 = vmatpush1.msra.mxu0 0.0
          %1257 = vmatprep.subr.mxu0 0.0
          %1258 = vmatpush1.msra.mxu0 0.0
          %1259 = vmatprep.subr.mxu0 0.0
          %1260 = vmatpush1.msra.mxu0 0.0
          %1261 = vmatprep.subr.mxu0 0.0
          %1262 = vmatpush1.msra.mxu0 0.0
          %1263 = vmatprep.subr.mxu0 0.0
          %1264 = vmatpush1.msra.mxu0 0.0
          %1265 = vmatprep.subr.mxu0 0.0
          %1266 = vmatpush1.msra.mxu0 0.0
          %1267 = vmatprep.subr.mxu0 0.0
          %1268 = vmatpush1.msra.mxu0 0.0
          %1269 = vmatprep.subr.mxu0 0.0
          %1270 = vmatpush1.msra.mxu0 %v1233
          %1271 = vmatprep.subr.mxu0 0.0
          %1272 = vmatpush1.msra.mxu0 %v1232
          %1273 = vmatprep.subr.mxu0 0.0
          %1274 = vmatpush1.msra.mxu0 %v1231
          %1275 = vmatprep.subr.mxu0 0.0
          %1276 = vmatpush1.msra.mxu0 %v1230
          %1277 = vmatprep.subr.mxu0 0.0
          %1278 = vmatpush2.msra.mxu0 0.0
          %1279 = vmatprep.subr.mxu0 0.0
          %1280 = vmatpush2.msra.mxu0 0.0
          %1281 = vmatprep.subr.mxu0 0.0
          %1282 = vmatpush2.msra.mxu0 0.0
          %1283 = vmatprep.subr.mxu0 0.0
          %1284 = vmatpush2.msra.mxu0 0.0
          %1285 = vmatprep.subr.mxu0 0.0
          %1286 = vmatpush2.msra.mxu0 0.0
          %1287 = vmatprep.subr.mxu0 0.0
          %1288 = vmatpush2.msra.mxu0 0.0
          %1289 = vmatprep.subr.mxu0 0.0
          %1290 = vmatpush2.msra.mxu0 0.0
          %1291 = vmatprep.subr.mxu0 0.0
          %1292 = vmatpush2.msra.mxu0 0.0
          %1293 = vmatprep.subr.mxu0 0.0
          %1294 = vmatpush2.msra.mxu0 0.0
          %1295 = vmatprep.subr.mxu0 0.0
          %1296 = vmatpush2.msra.mxu0 0.0
          %1297 = vmatprep.subr.mxu0 0.0
          %1298 = vmatpush2.msra.mxu0 0.0
          %1299 = vmatprep.subr.mxu0 0.0
          %1300 = vmatpush2.msra.mxu0 0.0
          %1301 = vmatprep.subr.mxu0 0.0
          %1302 = vmatpush2.msra.mxu0 0.0
          %1303 = vmatprep.subr.mxu0 0.0
          %1304 = vmatpush2.msra.mxu0 0.0
          %1305 = vmatprep.subr.mxu0 0.0
          %1306 = vmatpush2.msra.mxu0 0.0
          %1307 = vmatprep.subr.mxu0 0.0
          %1308 = vmatpush2.msra.mxu0 0.0
          %1309 = vmatprep.mubr.f32.mxu0 0.0
          %1310 = vmatmul.mubr.f32.gmra.mxu0 %v1243
          %v1311 = vpop.f32.mrf.mxu0
          %v1312 = vadd.f32 %v1239, %v1311
          %v1313 = vpop.f32.mrf.mxu0
          %1314 = vdwg.mxu0
          %1315 = vst.msk [vmem:[%s342] sm:$0xff] %vm1241, %v1312
        $region52: #{multi_head_attention.7} parent=43 // pred_fallthru
          _
        %s1316 = sand.u32 %s205, 1
        %s1317 = scalar_lea.sflag [#allocation6], %s1316
        %s1318 = sand.u32 %s205, 1
        %s1319 = smul.addr %s1318, 8
        %s1320 = scalar_lea.vmem [#allocation5], %s1319
        // Predicated region
        $region53: #{multi_head_attention.7} parent=43 // pred_check
          %p1321 = pneg %p215
        $region54: #{multi_head_attention.7} parent=43 // pred_check_branch
          %1323 = sbr.rel (%p1321) target = $region56
        $region55: #{multi_head_attention.7} parent=43 // pred_region
          %s1325 = ssub.s32 128, 128
          %1326 = vsyncadd %s1317, %s1325
          %s1327 = sadd.s32 %s26, %s25
          %s1328 = smul.addr %s1327, 128
          %s1329 = scalar_lea.hbm %s6, %s1328
          %s1331 = sshll.u32 %s1320, 4
          %s1332 = int_to_ptr.vmem [resolvable:$true] %s1331
          %1334 = dma.vmem_to_hbm [thread:$0]  %s1332, 128, %s1329, %s1317
        $region56: #{multi_head_attention.7} parent=43 // pred_fallthru
          _
      $region44: #{multi_head_attention.7} parent=5 // pred_fallthru
        _
      %p1335 = scmp.le.s32.totalorder 2, %s15
      // Predicated region
      $region57: #{multi_head_attention.7} parent=5 // pred_check
        %p1336 = pneg %p1335
      $region58: #{multi_head_attention.7} parent=5 // pred_check_branch
        %1338 = sbr.rel (%p1336) target = $region60
      $region59: #{multi_head_attention.7} parent=5 // pred_region
        %s1339 = ssub.s32 %s15, 2
        // Predicated region
        $region61: #{multi_head_attention.7} parent=59 // pred_check
          %p1340 = pneg %p221
        $region62: #{multi_head_attention.7} parent=59 // pred_check_branch
          %1342 = sbr.rel (%p1340) target = $region64
        $region63: #{multi_head_attention.7} parent=59 // pred_region
          %s1343 = sand.u32 %s206, 1
          %s1344 = scalar_lea.sflag [#allocation6], %s1343
          %s1345 = sand.u32 %s206, 1
          %s1346 = smul.addr %s1345, 8
          %s1347 = scalar_lea.vmem [#allocation5], %s1346
          %1348 = dma.done %s1344, 128
        $region64: #{multi_head_attention.7} parent=59 // pred_fallthru
          _
      $region60: #{multi_head_attention.7} parent=5 // pred_fallthru
        _
    $region6: #{multi_head_attention.7} parent=1 // loop_footer
      %s19 = sadd.s32 1, %s15
    $region7: #{multi_head_attention.7} parent=1 // loop_footer_branch
      %14 = sbr.rel target = $region3
    $region8: #{multi_head_attention.7} parent=1 // loop_exit
      _
    %1349 = vsyncpa [#allocation6], 1
    %s1350 = scalar_lea.sflag [#allocation6], 1
    %1351 = vsyncpa %s1350, 1

</llo_original>
